<compile_context>
chip_gen: v7x
topology: tpu7x:2x2x1
jax: 0.10.0
libtpu: 0.0.40
codegen_flags: <defaults>
</compile_context>

<pallas_src>
import math

import jax
import jax.numpy as jnp
from jax.experimental import pallas as pl
from jax.experimental.pallas import tpu as pltpu  # noqa: F401  (TPU backend; not otherwise needed here)

# ----------------------------- configuration --------------------------------
B = 2        # batch
S = 8        # src_len
D = 32       # d_model
H = 4        # heads
DK = 8       # d_k
DV = 8       # d_v
DFF = 64     # d_ff
EPS = 1e-6
NEG_INF = -1e18

PACK_W = 3 * H * DK   # 96 : lane width of the fused QKV weights / packed bias slab


# ------------------------------- kernel --------------------------------------
def encoder_layer_kernel(x_ref, bias_ref, wqkv_ref, wo_ref, w1_ref, w2_ref, vec_ref,
                         out_ref, attn_ref):
    # Whole arrays are VMEM-resident (no grid); everything here is a single pipeline step.
    xf = x_ref[...]                                   # (B*S, D)
    vecs = vec_ref[...]                               # (8, PACK_W) packed bias / LN params

    bqkv = vecs[0:1, :]                               # (1, 3*H*DK)  (Q part pre-scaled)
    bo   = vecs[1:2, :D]
    g1   = vecs[2:3, :D]
    be1  = vecs[3:4, :D]
    g2   = vecs[4:5, :D]
    be2  = vecs[5:6, :D]
    bf1  = vecs[6:7, :DFF]
    bf2  = vecs[7:8, :D]

    # ---- fused QKV projection for all heads & both batches at once ----
    qkv = jnp.dot(xf, wqkv_ref[...], preferred_element_type=jnp.float32) + bqkv   # (B*S, 3*H*DK)

    ctx_rows = []
    attn_rows = []
    for b in range(B):                                # static, tiny (B=2)
        qkv_b = qkv[b * S:(b + 1) * S, :]             # (S, 3*H*DK)
        bias_b = bias_ref[b]                          # (S, S) additive mask bias (head-invariant)
        p_heads = []
        c_heads = []
        for h in range(H):                            # static, tiny (H=4)
            q = qkv_b[:, h * DK:(h + 1) * DK]                              # (S, DK), already scaled
            k = qkv_b[:, H * DK + h * DK: H * DK + (h + 1) * DK]           # (S, DK)
            v = qkv_b[:, 2 * H * DK + h * DV: 2 * H * DK + (h + 1) * DV]   # (S, DV)

            s = jnp.dot(q, k.T, preferred_element_type=jnp.float32) + bias_b
            s = s - jnp.max(s, axis=-1, keepdims=True)
            e = jnp.exp(s)
            denom = jnp.sum(e, axis=-1, keepdims=True)
            r = pl.reciprocal(denom, approx=True)     # EUP slot
            r = r * (2.0 - denom * r)                 # one Newton step -> ~full f32 accuracy
            p = e * r                                 # softmax
            p_heads.append(p)
            c_heads.append(jnp.dot(p, v, preferred_element_type=jnp.float32))  # (S, DV)

        attn_rows.append(jnp.concatenate(p_heads, axis=1))    # (S, H*S)
        ctx_rows.append(jnp.concatenate(c_heads, axis=1))     # (S, H*DV)

    # single lane-dense store for the per-head attention output
    attn_ref[...] = jnp.concatenate(attn_rows, axis=0)        # (B*S, H*S)

    # ---- fused output projection (concat over heads == one matmul with Wo) ----
    ctx_cat = jnp.concatenate(ctx_rows, axis=0)               # (B*S, H*DV)
    ctx = jnp.dot(ctx_cat, wo_ref[...], preferred_element_type=jnp.float32) + bo   # (B*S, D)

    def layer_norm(z, g, bta):
        mu = jnp.mean(z, axis=-1, keepdims=True)
        var = jnp.mean((z - mu) ** 2, axis=-1, keepdims=True)
        return (z - mu) * jax.lax.rsqrt(var + EPS) * g + bta

    # ---- residual + post-attention layer norm ----
    out1 = layer_norm(ctx + xf, g1, be1)                      # (B*S, D)

    # ---- PositionwiseFeedForward: pre-norm, relu MLP, residual ----
    y = layer_norm(out1, g2, be2)
    h1 = jnp.maximum(jnp.dot(y, w1_ref[...], preferred_element_type=jnp.float32) + bf1, 0.0)
    z = jnp.dot(h1, w2_ref[...], preferred_element_type=jnp.float32) + bf2

    out_ref[...] = z + out1


# ------------------------------ wrapper ---------------------------------------
def transformer_encoder_layer(x, mask, params):
    (wq, bq, wk, bk, wv, bv, wo, bo, g1, be1, g2, be2, w1, bf1, w2, bf2) = params
    scale = jnp.float32(1.0 / math.sqrt(DK))

    # ---- wrapper-side (one-time-able) parameter packing ----
    # fused QKV weights, 1/sqrt(d_k) folded into the Q weights and Q biases
    wqkv = jnp.concatenate([
        (wq * scale).transpose(1, 0, 2).reshape(D, H * DK),
        wk.transpose(1, 0, 2).reshape(D, H * DK),
        wv.transpose(1, 0, 2).reshape(D, H * DV),
    ], axis=1)                                                # (D, 3*H*DK)
    bqkv = jnp.concatenate([
        (bq * scale).reshape(H * DK),
        bk.reshape(H * DK),
        bv.reshape(H * DV),
    ])                                                        # (3*H*DK,)
    wo_flat = wo.reshape(H * DV, D)                           # concat-over-heads == single matmul

    vecs = jnp.zeros((8, PACK_W), jnp.float32)                # all bias / LN vectors in one operand
    vecs = vecs.at[0, :].set(bqkv)
    vecs = vecs.at[1, :D].set(bo[0])
    vecs = vecs.at[2, :D].set(g1[0])
    vecs = vecs.at[3, :D].set(be1[0])
    vecs = vecs.at[4, :D].set(g2[0])
    vecs = vecs.at[5, :D].set(be2[0])
    vecs = vecs.at[6, :DFF].set(bf1[0])
    vecs = vecs.at[7, :D].set(bf2[0])

    xf = x.reshape(B * S, D)                                  # batch folded into sublanes
    attn_bias = jnp.where(mask != 0, jnp.float32(NEG_INF), jnp.float32(0.0))   # (B,S,S) additive

    out_flat, attn_packed = pl.pallas_call(
        encoder_layer_kernel,
        out_shape=(
            jax.ShapeDtypeStruct((B * S, D), jnp.float32),
            jax.ShapeDtypeStruct((B * S, H * S), jnp.float32),
        ),
        # no grid: single step, whole (tiny) arrays resident in VMEM
    )(xf, attn_bias, wqkv, wo_flat, w1, w2, vecs)

    out = out_flat.reshape(B, S, D)
    attn = attn_packed.reshape(B, S, H, S).transpose(0, 2, 1, 3)   # -> (B, H, S, S)
    return out, attn


# -------------------------- pure-JAX reference --------------------------------
def reference(x, mask, params):
    (wq, bq, wk, bk, wv, bv, wo, bo, g1, be1, g2, be2, w1, bf1, w2, bf2) = params

    def ln(z, g, b):
        mu = jnp.mean(z, axis=-1, keepdims=True)
        var = jnp.mean((z - mu) ** 2, axis=-1, keepdims=True)
        return (z - mu) * jax.lax.rsqrt(var + EPS) * g[0] + b[0]

    q = jnp.einsum("bsd,hdk->bhsk", x, wq) + bq[:, 0][None, :, None, :]
    k = jnp.einsum("bsd,hdk->bhsk", x, wk) + bk[:, 0][None, :, None, :]
    v = jnp.einsum("bsd,hdk->bhsk", x, wv) + bv[:, 0][None, :, None, :]
    s = jnp.einsum("bhqk,bhsk->bhqs", q, k) / math.sqrt(DK)
    s = jnp.where(mask[:, None, :, :] != 0, NEG_INF, s)
    p = jax.nn.softmax(s, axis=-1)
    c = jnp.einsum("bhqs,bhsv->bhqv", p, v)
    ctx = jnp.einsum("bhqv,hvd->bqd", c, wo) + bo[0]
    out1 = ln(ctx + x, g1, be1)
    y = ln(out1, g2, be2)
    z = jnp.maximum(y @ w1 + bf1[0], 0.0) @ w2 + bf2[0]
    return z + out1, p


# --------------------------------- main ----------------------------------------
if __name__ == "__main__":
    key = jax.random.PRNGKey(0)
    keys = jax.random.split(key, 12)

    x = jax.random.normal(keys[0], (B, S, D), dtype=jnp.float32)

    # padding mask: batch 0 fully valid, batch 1 has last 2 positions masked
    lengths = jnp.array([S, S - 2], dtype=jnp.int32)
    key_pos = jnp.arange(S)[None, None, :]                  # (1, 1, S)
    mask = (key_pos >= lengths[:, None, None]).astype(jnp.int32)
    mask = jnp.broadcast_to(mask, (B, S, S))                # (B, S, S)

    w_scale = 0.05
    params = (
        w_scale * jax.random.normal(keys[1], (H, D, DK), jnp.float32),   # wq
        w_scale * jax.random.normal(keys[2], (H, 1, DK), jnp.float32),   # bq
        w_scale * jax.random.normal(keys[3], (H, D, DK), jnp.float32),   # wk
        w_scale * jax.random.normal(keys[4], (H, 1, DK), jnp.float32),   # bk
        w_scale * jax.random.normal(keys[5], (H, D, DV), jnp.float32),   # wv
        w_scale * jax.random.normal(keys[6], (H, 1, DV), jnp.float32),   # bv
        w_scale * jax.random.normal(keys[7], (H, DV, D), jnp.float32),   # wo (final linear, per head)
        jnp.zeros((1, D), jnp.float32),                                  # bo
        jnp.ones((1, D), jnp.float32),                                   # ln1 gamma
        jnp.zeros((1, D), jnp.float32),                                  # ln1 beta
        jnp.ones((1, D), jnp.float32),                                   # ln2 gamma (inside FFN)
        jnp.zeros((1, D), jnp.float32),                                  # ln2 beta
        w_scale * jax.random.normal(keys[8], (D, DFF), jnp.float32),     # ffn w1
        jnp.zeros((1, DFF), jnp.float32),                                # ffn b1
        w_scale * jax.random.normal(keys[9], (DFF, D), jnp.float32),     # ffn w2
        jnp.zeros((1, D), jnp.float32),                                  # ffn b2
    )

    out, attn = transformer_encoder_layer(x, mask, params)
    jax.block_until_ready((out, attn))

    out_ref, attn_ref = reference(x, mask, params)
    assert jnp.allclose(out, out_ref, atol=1e-4, rtol=1e-4), "output mismatch"
    assert jnp.allclose(attn, attn_ref, atol=1e-4, rtol=1e-4), "attention mismatch"

    print("KERNEL_OK")
</pallas_src>

<mosaic_0001>
module attributes {stable_mosaic.version = 11 : i64} {
  func.func @encoder_layer_kernel(%arg0: memref<16x32xf32, #tpu.memory_space<vmem>>, %arg1: memref<2x8x8xf32, #tpu.memory_space<vmem>>, %arg2: memref<32x96xf32, #tpu.memory_space<vmem>>, %arg3: memref<32x32xf32, #tpu.memory_space<vmem>>, %arg4: memref<32x64xf32, #tpu.memory_space<vmem>>, %arg5: memref<64x32xf32, #tpu.memory_space<vmem>>, %arg6: memref<8x96xf32, #tpu.memory_space<vmem>>, %arg7: memref<16x32xf32, #tpu.memory_space<vmem>>, %arg8: memref<16x32xf32, #tpu.memory_space<vmem>>) attributes {dimension_semantics = [], scalar_prefetch = 0 : i64, scratch_operands = 0 : i64, tpu.core_type = #tpu.core_type<tc>} {
    %c0 = arith.constant 0 : index
    %c0_0 = arith.constant 0 : index
    %0 = vector.load %arg0[%c0, %c0_0] : memref<16x32xf32, #tpu.memory_space<vmem>>, vector<16x32xf32>
    %c0_1 = arith.constant 0 : index
    %c0_2 = arith.constant 0 : index
    %1 = vector.load %arg6[%c0_1, %c0_2] : memref<8x96xf32, #tpu.memory_space<vmem>>, vector<8x96xf32>
    %2 = vector.extract_strided_slice %1 {offsets = [0, 0], sizes = [1, 96], strides = [1, 1]} : vector<8x96xf32> to vector<1x96xf32>
    %3 = vector.extract_strided_slice %1 {offsets = [1, 0], sizes = [1, 32], strides = [1, 1]} : vector<8x96xf32> to vector<1x32xf32>
    %4 = vector.extract_strided_slice %1 {offsets = [2, 0], sizes = [1, 32], strides = [1, 1]} : vector<8x96xf32> to vector<1x32xf32>
    %5 = vector.extract_strided_slice %1 {offsets = [3, 0], sizes = [1, 32], strides = [1, 1]} : vector<8x96xf32> to vector<1x32xf32>
    %6 = vector.extract_strided_slice %1 {offsets = [4, 0], sizes = [1, 32], strides = [1, 1]} : vector<8x96xf32> to vector<1x32xf32>
    %7 = vector.extract_strided_slice %1 {offsets = [5, 0], sizes = [1, 32], strides = [1, 1]} : vector<8x96xf32> to vector<1x32xf32>
    %8 = vector.extract_strided_slice %1 {offsets = [6, 0], sizes = [1, 64], strides = [1, 1]} : vector<8x96xf32> to vector<1x64xf32>
    %9 = vector.extract_strided_slice %1 {offsets = [7, 0], sizes = [1, 32], strides = [1, 1]} : vector<8x96xf32> to vector<1x32xf32>
    %c0_3 = arith.constant 0 : index
    %c0_4 = arith.constant 0 : index
    %10 = vector.load %arg2[%c0_3, %c0_4] : memref<32x96xf32, #tpu.memory_space<vmem>>, vector<32x96xf32>
    %cst = arith.constant dense<0.000000e+00> : vector<16x96xf32>
    %11 = tpu.matmul %0, %10, %cst {dimension_numbers = #tpu.dot_dimension_numbers<[1], [0], [0], [1], [0, 0, 1, 1], [], []>} : vector<16x32xf32>, vector<32x96xf32>, vector<16x96xf32> -> vector<16x96xf32>
    %12 = vector.broadcast %2 : vector<1x96xf32> to vector<16x96xf32>
    %13 = arith.addf %11, %12 : vector<16x96xf32>
    %14 = vector.extract_strided_slice %13 {offsets = [0, 0], sizes = [8, 96], strides = [1, 1]} : vector<16x96xf32> to vector<8x96xf32>
    %c0_5 = arith.constant 0 : index
    %c0_6 = arith.constant 0 : index
    %c0_7 = arith.constant 0 : index
    %15 = vector.load %arg1[%c0_5, %c0_6, %c0_7] : memref<2x8x8xf32, #tpu.memory_space<vmem>>, vector<1x8x8xf32>
    %16 = vector.shape_cast %15 : vector<1x8x8xf32> to vector<8x8xf32>
    %17 = vector.extract_strided_slice %14 {offsets = [0, 0], sizes = [8, 8], strides = [1, 1]} : vector<8x96xf32> to vector<8x8xf32>
    %18 = vector.extract_strided_slice %14 {offsets = [0, 32], sizes = [8, 8], strides = [1, 1]} : vector<8x96xf32> to vector<8x8xf32>
    %19 = vector.extract_strided_slice %14 {offsets = [0, 64], sizes = [8, 8], strides = [1, 1]} : vector<8x96xf32> to vector<8x8xf32>
    %20 = tpu.transpose %18, [1, 0] : vector<8x8xf32> -> vector<8x8xf32>
    %cst_8 = arith.constant dense<0.000000e+00> : vector<8x8xf32>
    %21 = tpu.matmul %17, %20, %cst_8 {dimension_numbers = #tpu.dot_dimension_numbers<[1], [0], [0], [1], [0, 0, 1, 1], [], []>} : vector<8x8xf32>, vector<8x8xf32>, vector<8x8xf32> -> vector<8x8xf32>
    %22 = arith.addf %21, %16 : vector<8x8xf32>
    %cst_9 = arith.constant dense<0xFF800000> : vector<8xf32>
    %23 = vector.multi_reduction <maximumf>, %22, %cst_9 [1] : vector<8x8xf32> to vector<8xf32>
    %24 = vector.shape_cast %23 : vector<8xf32> to vector<8x1xf32>
    %25 = vector.broadcast %24 : vector<8x1xf32> to vector<8x8xf32>
    %26 = arith.subf %22, %25 : vector<8x8xf32>
    %27 = math.exp %26 : vector<8x8xf32>
    %cst_10 = arith.constant dense<0.000000e+00> : vector<8xf32>
    %28 = vector.multi_reduction <add>, %27, %cst_10 [1] : vector<8x8xf32> to vector<8xf32>
    %29 = vector.shape_cast %28 : vector<8xf32> to vector<8x1xf32>
    %30 = tpu.reciprocal %29 {approx = true} : vector<8x1xf32> -> vector<8x1xf32>
    %31 = arith.mulf %29, %30 : vector<8x1xf32>
    %cst_11 = arith.constant 2.000000e+00 : f32
    %32 = vector.broadcast %cst_11 : f32 to vector<8x1xf32>
    %33 = arith.subf %32, %31 : vector<8x1xf32>
    %34 = arith.mulf %30, %33 : vector<8x1xf32>
    %35 = vector.broadcast %34 : vector<8x1xf32> to vector<8x8xf32>
    %36 = arith.mulf %27, %35 : vector<8x8xf32>
    %cst_12 = arith.constant dense<0.000000e+00> : vector<8x8xf32>
    %37 = tpu.matmul %36, %19, %cst_12 {dimension_numbers = #tpu.dot_dimension_numbers<[1], [0], [0], [1], [0, 0, 1, 1], [], []>} : vector<8x8xf32>, vector<8x8xf32>, vector<8x8xf32> -> vector<8x8xf32>
    %38 = vector.extract_strided_slice %14 {offsets = [0, 8], sizes = [8, 8], strides = [1, 1]} : vector<8x96xf32> to vector<8x8xf32>
    %39 = vector.extract_strided_slice %14 {offsets = [0, 40], sizes = [8, 8], strides = [1, 1]} : vector<8x96xf32> to vector<8x8xf32>
    %40 = vector.extract_strided_slice %14 {offsets = [0, 72], sizes = [8, 8], strides = [1, 1]} : vector<8x96xf32> to vector<8x8xf32>
    %41 = tpu.transpose %39, [1, 0] : vector<8x8xf32> -> vector<8x8xf32>
    %cst_13 = arith.constant dense<0.000000e+00> : vector<8x8xf32>
    %42 = tpu.matmul %38, %41, %cst_13 {dimension_numbers = #tpu.dot_dimension_numbers<[1], [0], [0], [1], [0, 0, 1, 1], [], []>} : vector<8x8xf32>, vector<8x8xf32>, vector<8x8xf32> -> vector<8x8xf32>
    %43 = arith.addf %42, %16 : vector<8x8xf32>
    %cst_14 = arith.constant dense<0xFF800000> : vector<8xf32>
    %44 = vector.multi_reduction <maximumf>, %43, %cst_14 [1] : vector<8x8xf32> to vector<8xf32>
    %45 = vector.shape_cast %44 : vector<8xf32> to vector<8x1xf32>
    %46 = vector.broadcast %45 : vector<8x1xf32> to vector<8x8xf32>
    %47 = arith.subf %43, %46 : vector<8x8xf32>
    %48 = math.exp %47 : vector<8x8xf32>
    %cst_15 = arith.constant dense<0.000000e+00> : vector<8xf32>
    %49 = vector.multi_reduction <add>, %48, %cst_15 [1] : vector<8x8xf32> to vector<8xf32>
    %50 = vector.shape_cast %49 : vector<8xf32> to vector<8x1xf32>
    %51 = tpu.reciprocal %50 {approx = true} : vector<8x1xf32> -> vector<8x1xf32>
    %52 = arith.mulf %50, %51 : vector<8x1xf32>
    %cst_16 = arith.constant 2.000000e+00 : f32
    %53 = vector.broadcast %cst_16 : f32 to vector<8x1xf32>
    %54 = arith.subf %53, %52 : vector<8x1xf32>
    %55 = arith.mulf %51, %54 : vector<8x1xf32>
    %56 = vector.broadcast %55 : vector<8x1xf32> to vector<8x8xf32>
    %57 = arith.mulf %48, %56 : vector<8x8xf32>
    %cst_17 = arith.constant dense<0.000000e+00> : vector<8x8xf32>
    %58 = tpu.matmul %57, %40, %cst_17 {dimension_numbers = #tpu.dot_dimension_numbers<[1], [0], [0], [1], [0, 0, 1, 1], [], []>} : vector<8x8xf32>, vector<8x8xf32>, vector<8x8xf32> -> vector<8x8xf32>
    %59 = vector.extract_strided_slice %14 {offsets = [0, 16], sizes = [8, 8], strides = [1, 1]} : vector<8x96xf32> to vector<8x8xf32>
    %60 = vector.extract_strided_slice %14 {offsets = [0, 48], sizes = [8, 8], strides = [1, 1]} : vector<8x96xf32> to vector<8x8xf32>
    %61 = vector.extract_strided_slice %14 {offsets = [0, 80], sizes = [8, 8], strides = [1, 1]} : vector<8x96xf32> to vector<8x8xf32>
    %62 = tpu.transpose %60, [1, 0] : vector<8x8xf32> -> vector<8x8xf32>
    %cst_18 = arith.constant dense<0.000000e+00> : vector<8x8xf32>
    %63 = tpu.matmul %59, %62, %cst_18 {dimension_numbers = #tpu.dot_dimension_numbers<[1], [0], [0], [1], [0, 0, 1, 1], [], []>} : vector<8x8xf32>, vector<8x8xf32>, vector<8x8xf32> -> vector<8x8xf32>
    %64 = arith.addf %63, %16 : vector<8x8xf32>
    %cst_19 = arith.constant dense<0xFF800000> : vector<8xf32>
    %65 = vector.multi_reduction <maximumf>, %64, %cst_19 [1] : vector<8x8xf32> to vector<8xf32>
    %66 = vector.shape_cast %65 : vector<8xf32> to vector<8x1xf32>
    %67 = vector.broadcast %66 : vector<8x1xf32> to vector<8x8xf32>
    %68 = arith.subf %64, %67 : vector<8x8xf32>
    %69 = math.exp %68 : vector<8x8xf32>
    %cst_20 = arith.constant dense<0.000000e+00> : vector<8xf32>
    %70 = vector.multi_reduction <add>, %69, %cst_20 [1] : vector<8x8xf32> to vector<8xf32>
    %71 = vector.shape_cast %70 : vector<8xf32> to vector<8x1xf32>
    %72 = tpu.reciprocal %71 {approx = true} : vector<8x1xf32> -> vector<8x1xf32>
    %73 = arith.mulf %71, %72 : vector<8x1xf32>
    %cst_21 = arith.constant 2.000000e+00 : f32
    %74 = vector.broadcast %cst_21 : f32 to vector<8x1xf32>
    %75 = arith.subf %74, %73 : vector<8x1xf32>
    %76 = arith.mulf %72, %75 : vector<8x1xf32>
    %77 = vector.broadcast %76 : vector<8x1xf32> to vector<8x8xf32>
    %78 = arith.mulf %69, %77 : vector<8x8xf32>
    %cst_22 = arith.constant dense<0.000000e+00> : vector<8x8xf32>
    %79 = tpu.matmul %78, %61, %cst_22 {dimension_numbers = #tpu.dot_dimension_numbers<[1], [0], [0], [1], [0, 0, 1, 1], [], []>} : vector<8x8xf32>, vector<8x8xf32>, vector<8x8xf32> -> vector<8x8xf32>
    %80 = vector.extract_strided_slice %14 {offsets = [0, 24], sizes = [8, 8], strides = [1, 1]} : vector<8x96xf32> to vector<8x8xf32>
    %81 = vector.extract_strided_slice %14 {offsets = [0, 56], sizes = [8, 8], strides = [1, 1]} : vector<8x96xf32> to vector<8x8xf32>
    %82 = vector.extract_strided_slice %14 {offsets = [0, 88], sizes = [8, 8], strides = [1, 1]} : vector<8x96xf32> to vector<8x8xf32>
    %83 = tpu.transpose %81, [1, 0] : vector<8x8xf32> -> vector<8x8xf32>
    %cst_23 = arith.constant dense<0.000000e+00> : vector<8x8xf32>
    %84 = tpu.matmul %80, %83, %cst_23 {dimension_numbers = #tpu.dot_dimension_numbers<[1], [0], [0], [1], [0, 0, 1, 1], [], []>} : vector<8x8xf32>, vector<8x8xf32>, vector<8x8xf32> -> vector<8x8xf32>
    %85 = arith.addf %84, %16 : vector<8x8xf32>
    %cst_24 = arith.constant dense<0xFF800000> : vector<8xf32>
    %86 = vector.multi_reduction <maximumf>, %85, %cst_24 [1] : vector<8x8xf32> to vector<8xf32>
    %87 = vector.shape_cast %86 : vector<8xf32> to vector<8x1xf32>
    %88 = vector.broadcast %87 : vector<8x1xf32> to vector<8x8xf32>
    %89 = arith.subf %85, %88 : vector<8x8xf32>
    %90 = math.exp %89 : vector<8x8xf32>
    %cst_25 = arith.constant dense<0.000000e+00> : vector<8xf32>
    %91 = vector.multi_reduction <add>, %90, %cst_25 [1] : vector<8x8xf32> to vector<8xf32>
    %92 = vector.shape_cast %91 : vector<8xf32> to vector<8x1xf32>
    %93 = tpu.reciprocal %92 {approx = true} : vector<8x1xf32> -> vector<8x1xf32>
    %94 = arith.mulf %92, %93 : vector<8x1xf32>
    %cst_26 = arith.constant 2.000000e+00 : f32
    %95 = vector.broadcast %cst_26 : f32 to vector<8x1xf32>
    %96 = arith.subf %95, %94 : vector<8x1xf32>
    %97 = arith.mulf %93, %96 : vector<8x1xf32>
    %98 = vector.broadcast %97 : vector<8x1xf32> to vector<8x8xf32>
    %99 = arith.mulf %90, %98 : vector<8x8xf32>
    %cst_27 = arith.constant dense<0.000000e+00> : vector<8x8xf32>
    %100 = tpu.matmul %99, %82, %cst_27 {dimension_numbers = #tpu.dot_dimension_numbers<[1], [0], [0], [1], [0, 0, 1, 1], [], []>} : vector<8x8xf32>, vector<8x8xf32>, vector<8x8xf32> -> vector<8x8xf32>
    %101 = tpu.concatenate %36, %57, %78, %99 in 1 : vector<8x8xf32>, vector<8x8xf32>, vector<8x8xf32>, vector<8x8xf32> -> vector<8x32xf32>
    %102 = tpu.concatenate %37, %58, %79, %100 in 1 : vector<8x8xf32>, vector<8x8xf32>, vector<8x8xf32>, vector<8x8xf32> -> vector<8x32xf32>
    %103 = vector.extract_strided_slice %13 {offsets = [8, 0], sizes = [8, 96], strides = [1, 1]} : vector<16x96xf32> to vector<8x96xf32>
    %c1 = arith.constant 1 : index
    %c0_28 = arith.constant 0 : index
    %c0_29 = arith.constant 0 : index
    %104 = vector.load %arg1[%c1, %c0_28, %c0_29] : memref<2x8x8xf32, #tpu.memory_space<vmem>>, vector<1x8x8xf32>
    %105 = vector.shape_cast %104 : vector<1x8x8xf32> to vector<8x8xf32>
    %106 = vector.extract_strided_slice %103 {offsets = [0, 0], sizes = [8, 8], strides = [1, 1]} : vector<8x96xf32> to vector<8x8xf32>
    %107 = vector.extract_strided_slice %103 {offsets = [0, 32], sizes = [8, 8], strides = [1, 1]} : vector<8x96xf32> to vector<8x8xf32>
    %108 = vector.extract_strided_slice %103 {offsets = [0, 64], sizes = [8, 8], strides = [1, 1]} : vector<8x96xf32> to vector<8x8xf32>
    %109 = tpu.transpose %107, [1, 0] : vector<8x8xf32> -> vector<8x8xf32>
    %cst_30 = arith.constant dense<0.000000e+00> : vector<8x8xf32>
    %110 = tpu.matmul %106, %109, %cst_30 {dimension_numbers = #tpu.dot_dimension_numbers<[1], [0], [0], [1], [0, 0, 1, 1], [], []>} : vector<8x8xf32>, vector<8x8xf32>, vector<8x8xf32> -> vector<8x8xf32>
    %111 = arith.addf %110, %105 : vector<8x8xf32>
    %cst_31 = arith.constant dense<0xFF800000> : vector<8xf32>
    %112 = vector.multi_reduction <maximumf>, %111, %cst_31 [1] : vector<8x8xf32> to vector<8xf32>
    %113 = vector.shape_cast %112 : vector<8xf32> to vector<8x1xf32>
    %114 = vector.broadcast %113 : vector<8x1xf32> to vector<8x8xf32>
    %115 = arith.subf %111, %114 : vector<8x8xf32>
    %116 = math.exp %115 : vector<8x8xf32>
    %cst_32 = arith.constant dense<0.000000e+00> : vector<8xf32>
    %117 = vector.multi_reduction <add>, %116, %cst_32 [1] : vector<8x8xf32> to vector<8xf32>
    %118 = vector.shape_cast %117 : vector<8xf32> to vector<8x1xf32>
    %119 = tpu.reciprocal %118 {approx = true} : vector<8x1xf32> -> vector<8x1xf32>
    %120 = arith.mulf %118, %119 : vector<8x1xf32>
    %cst_33 = arith.constant 2.000000e+00 : f32
    %121 = vector.broadcast %cst_33 : f32 to vector<8x1xf32>
    %122 = arith.subf %121, %120 : vector<8x1xf32>
    %123 = arith.mulf %119, %122 : vector<8x1xf32>
    %124 = vector.broadcast %123 : vector<8x1xf32> to vector<8x8xf32>
    %125 = arith.mulf %116, %124 : vector<8x8xf32>
    %cst_34 = arith.constant dense<0.000000e+00> : vector<8x8xf32>
    %126 = tpu.matmul %125, %108, %cst_34 {dimension_numbers = #tpu.dot_dimension_numbers<[1], [0], [0], [1], [0, 0, 1, 1], [], []>} : vector<8x8xf32>, vector<8x8xf32>, vector<8x8xf32> -> vector<8x8xf32>
    %127 = vector.extract_strided_slice %103 {offsets = [0, 8], sizes = [8, 8], strides = [1, 1]} : vector<8x96xf32> to vector<8x8xf32>
    %128 = vector.extract_strided_slice %103 {offsets = [0, 40], sizes = [8, 8], strides = [1, 1]} : vector<8x96xf32> to vector<8x8xf32>
    %129 = vector.extract_strided_slice %103 {offsets = [0, 72], sizes = [8, 8], strides = [1, 1]} : vector<8x96xf32> to vector<8x8xf32>
    %130 = tpu.transpose %128, [1, 0] : vector<8x8xf32> -> vector<8x8xf32>
    %cst_35 = arith.constant dense<0.000000e+00> : vector<8x8xf32>
    %131 = tpu.matmul %127, %130, %cst_35 {dimension_numbers = #tpu.dot_dimension_numbers<[1], [0], [0], [1], [0, 0, 1, 1], [], []>} : vector<8x8xf32>, vector<8x8xf32>, vector<8x8xf32> -> vector<8x8xf32>
    %132 = arith.addf %131, %105 : vector<8x8xf32>
    %cst_36 = arith.constant dense<0xFF800000> : vector<8xf32>
    %133 = vector.multi_reduction <maximumf>, %132, %cst_36 [1] : vector<8x8xf32> to vector<8xf32>
    %134 = vector.shape_cast %133 : vector<8xf32> to vector<8x1xf32>
    %135 = vector.broadcast %134 : vector<8x1xf32> to vector<8x8xf32>
    %136 = arith.subf %132, %135 : vector<8x8xf32>
    %137 = math.exp %136 : vector<8x8xf32>
    %cst_37 = arith.constant dense<0.000000e+00> : vector<8xf32>
    %138 = vector.multi_reduction <add>, %137, %cst_37 [1] : vector<8x8xf32> to vector<8xf32>
    %139 = vector.shape_cast %138 : vector<8xf32> to vector<8x1xf32>
    %140 = tpu.reciprocal %139 {approx = true} : vector<8x1xf32> -> vector<8x1xf32>
    %141 = arith.mulf %139, %140 : vector<8x1xf32>
    %cst_38 = arith.constant 2.000000e+00 : f32
    %142 = vector.broadcast %cst_38 : f32 to vector<8x1xf32>
    %143 = arith.subf %142, %141 : vector<8x1xf32>
    %144 = arith.mulf %140, %143 : vector<8x1xf32>
    %145 = vector.broadcast %144 : vector<8x1xf32> to vector<8x8xf32>
    %146 = arith.mulf %137, %145 : vector<8x8xf32>
    %cst_39 = arith.constant dense<0.000000e+00> : vector<8x8xf32>
    %147 = tpu.matmul %146, %129, %cst_39 {dimension_numbers = #tpu.dot_dimension_numbers<[1], [0], [0], [1], [0, 0, 1, 1], [], []>} : vector<8x8xf32>, vector<8x8xf32>, vector<8x8xf32> -> vector<8x8xf32>
    %148 = vector.extract_strided_slice %103 {offsets = [0, 16], sizes = [8, 8], strides = [1, 1]} : vector<8x96xf32> to vector<8x8xf32>
    %149 = vector.extract_strided_slice %103 {offsets = [0, 48], sizes = [8, 8], strides = [1, 1]} : vector<8x96xf32> to vector<8x8xf32>
    %150 = vector.extract_strided_slice %103 {offsets = [0, 80], sizes = [8, 8], strides = [1, 1]} : vector<8x96xf32> to vector<8x8xf32>
    %151 = tpu.transpose %149, [1, 0] : vector<8x8xf32> -> vector<8x8xf32>
    %cst_40 = arith.constant dense<0.000000e+00> : vector<8x8xf32>
    %152 = tpu.matmul %148, %151, %cst_40 {dimension_numbers = #tpu.dot_dimension_numbers<[1], [0], [0], [1], [0, 0, 1, 1], [], []>} : vector<8x8xf32>, vector<8x8xf32>, vector<8x8xf32> -> vector<8x8xf32>
    %153 = arith.addf %152, %105 : vector<8x8xf32>
    %cst_41 = arith.constant dense<0xFF800000> : vector<8xf32>
    %154 = vector.multi_reduction <maximumf>, %153, %cst_41 [1] : vector<8x8xf32> to vector<8xf32>
    %155 = vector.shape_cast %154 : vector<8xf32> to vector<8x1xf32>
    %156 = vector.broadcast %155 : vector<8x1xf32> to vector<8x8xf32>
    %157 = arith.subf %153, %156 : vector<8x8xf32>
    %158 = math.exp %157 : vector<8x8xf32>
    %cst_42 = arith.constant dense<0.000000e+00> : vector<8xf32>
    %159 = vector.multi_reduction <add>, %158, %cst_42 [1] : vector<8x8xf32> to vector<8xf32>
    %160 = vector.shape_cast %159 : vector<8xf32> to vector<8x1xf32>
    %161 = tpu.reciprocal %160 {approx = true} : vector<8x1xf32> -> vector<8x1xf32>
    %162 = arith.mulf %160, %161 : vector<8x1xf32>
    %cst_43 = arith.constant 2.000000e+00 : f32
    %163 = vector.broadcast %cst_43 : f32 to vector<8x1xf32>
    %164 = arith.subf %163, %162 : vector<8x1xf32>
    %165 = arith.mulf %161, %164 : vector<8x1xf32>
    %166 = vector.broadcast %165 : vector<8x1xf32> to vector<8x8xf32>
    %167 = arith.mulf %158, %166 : vector<8x8xf32>
    %cst_44 = arith.constant dense<0.000000e+00> : vector<8x8xf32>
    %168 = tpu.matmul %167, %150, %cst_44 {dimension_numbers = #tpu.dot_dimension_numbers<[1], [0], [0], [1], [0, 0, 1, 1], [], []>} : vector<8x8xf32>, vector<8x8xf32>, vector<8x8xf32> -> vector<8x8xf32>
    %169 = vector.extract_strided_slice %103 {offsets = [0, 24], sizes = [8, 8], strides = [1, 1]} : vector<8x96xf32> to vector<8x8xf32>
    %170 = vector.extract_strided_slice %103 {offsets = [0, 56], sizes = [8, 8], strides = [1, 1]} : vector<8x96xf32> to vector<8x8xf32>
    %171 = vector.extract_strided_slice %103 {offsets = [0, 88], sizes = [8, 8], strides = [1, 1]} : vector<8x96xf32> to vector<8x8xf32>
    %172 = tpu.transpose %170, [1, 0] : vector<8x8xf32> -> vector<8x8xf32>
    %cst_45 = arith.constant dense<0.000000e+00> : vector<8x8xf32>
    %173 = tpu.matmul %169, %172, %cst_45 {dimension_numbers = #tpu.dot_dimension_numbers<[1], [0], [0], [1], [0, 0, 1, 1], [], []>} : vector<8x8xf32>, vector<8x8xf32>, vector<8x8xf32> -> vector<8x8xf32>
    %174 = arith.addf %173, %105 : vector<8x8xf32>
    %cst_46 = arith.constant dense<0xFF800000> : vector<8xf32>
    %175 = vector.multi_reduction <maximumf>, %174, %cst_46 [1] : vector<8x8xf32> to vector<8xf32>
    %176 = vector.shape_cast %175 : vector<8xf32> to vector<8x1xf32>
    %177 = vector.broadcast %176 : vector<8x1xf32> to vector<8x8xf32>
    %178 = arith.subf %174, %177 : vector<8x8xf32>
    %179 = math.exp %178 : vector<8x8xf32>
    %cst_47 = arith.constant dense<0.000000e+00> : vector<8xf32>
    %180 = vector.multi_reduction <add>, %179, %cst_47 [1] : vector<8x8xf32> to vector<8xf32>
    %181 = vector.shape_cast %180 : vector<8xf32> to vector<8x1xf32>
    %182 = tpu.reciprocal %181 {approx = true} : vector<8x1xf32> -> vector<8x1xf32>
    %183 = arith.mulf %181, %182 : vector<8x1xf32>
    %cst_48 = arith.constant 2.000000e+00 : f32
    %184 = vector.broadcast %cst_48 : f32 to vector<8x1xf32>
    %185 = arith.subf %184, %183 : vector<8x1xf32>
    %186 = arith.mulf %182, %185 : vector<8x1xf32>
    %187 = vector.broadcast %186 : vector<8x1xf32> to vector<8x8xf32>
    %188 = arith.mulf %179, %187 : vector<8x8xf32>
    %cst_49 = arith.constant dense<0.000000e+00> : vector<8x8xf32>
    %189 = tpu.matmul %188, %171, %cst_49 {dimension_numbers = #tpu.dot_dimension_numbers<[1], [0], [0], [1], [0, 0, 1, 1], [], []>} : vector<8x8xf32>, vector<8x8xf32>, vector<8x8xf32> -> vector<8x8xf32>
    %190 = tpu.concatenate %125, %146, %167, %188 in 1 : vector<8x8xf32>, vector<8x8xf32>, vector<8x8xf32>, vector<8x8xf32> -> vector<8x32xf32>
    %191 = tpu.concatenate %126, %147, %168, %189 in 1 : vector<8x8xf32>, vector<8x8xf32>, vector<8x8xf32>, vector<8x8xf32> -> vector<8x32xf32>
    %192 = tpu.concatenate %101, %190 in 0 : vector<8x32xf32>, vector<8x32xf32> -> vector<16x32xf32>
    %c0_50 = arith.constant 0 : index
    %c0_51 = arith.constant 0 : index
    %193 = vector.load %arg8[%c0_50, %c0_51] : memref<16x32xf32, #tpu.memory_space<vmem>>, vector<16x32xf32>
    tpu.vector_store %arg8[%c0_50, %c0_51], %192 {strides = array<i32>} : memref<16x32xf32, #tpu.memory_space<vmem>>, vector<16x32xf32>,
    %194 = tpu.concatenate %102, %191 in 0 : vector<8x32xf32>, vector<8x32xf32> -> vector<16x32xf32>
    %c0_52 = arith.constant 0 : index
    %c0_53 = arith.constant 0 : index
    %195 = vector.load %arg3[%c0_52, %c0_53] : memref<32x32xf32, #tpu.memory_space<vmem>>, vector<32x32xf32>
    %cst_54 = arith.constant dense<0.000000e+00> : vector<16x32xf32>
    %196 = tpu.matmul %194, %195, %cst_54 {dimension_numbers = #tpu.dot_dimension_numbers<[1], [0], [0], [1], [0, 0, 1, 1], [], []>} : vector<16x32xf32>, vector<32x32xf32>, vector<16x32xf32> -> vector<16x32xf32>
    %197 = vector.broadcast %3 : vector<1x32xf32> to vector<16x32xf32>
    %198 = arith.addf %196, %197 : vector<16x32xf32>
    %199 = arith.addf %198, %0 : vector<16x32xf32>
    %cst_55 = arith.constant dense<0.000000e+00> : vector<16xf32>
    %200 = vector.multi_reduction <add>, %199, %cst_55 [1] : vector<16x32xf32> to vector<16xf32>
    %201 = vector.shape_cast %200 : vector<16xf32> to vector<16x1xf32>
    %cst_56 = arith.constant 3.200000e+01 : f32
    %202 = vector.broadcast %cst_56 : f32 to vector<16x1xf32>
    %203 = arith.divf %201, %202 : vector<16x1xf32>
    %204 = vector.broadcast %203 : vector<16x1xf32> to vector<16x32xf32>
    %205 = arith.subf %199, %204 : vector<16x32xf32>
    %206 = arith.mulf %205, %205 : vector<16x32xf32>
    %cst_57 = arith.constant dense<0.000000e+00> : vector<16xf32>
    %207 = vector.multi_reduction <add>, %206, %cst_57 [1] : vector<16x32xf32> to vector<16xf32>
    %208 = vector.shape_cast %207 : vector<16xf32> to vector<16x1xf32>
    %cst_58 = arith.constant 3.200000e+01 : f32
    %209 = vector.broadcast %cst_58 : f32 to vector<16x1xf32>
    %210 = arith.divf %208, %209 : vector<16x1xf32>
    %211 = vector.broadcast %203 : vector<16x1xf32> to vector<16x32xf32>
    %212 = arith.subf %199, %211 : vector<16x32xf32>
    %cst_59 = arith.constant 9.99999997E-7 : f32
    %213 = vector.broadcast %cst_59 : f32 to vector<16x1xf32>
    %214 = arith.addf %210, %213 : vector<16x1xf32>
    %215 = math.rsqrt %214 : vector<16x1xf32>
    %216 = vector.broadcast %215 : vector<16x1xf32> to vector<16x32xf32>
    %217 = arith.mulf %212, %216 : vector<16x32xf32>
    %218 = vector.broadcast %4 : vector<1x32xf32> to vector<16x32xf32>
    %219 = arith.mulf %217, %218 : vector<16x32xf32>
    %220 = vector.broadcast %5 : vector<1x32xf32> to vector<16x32xf32>
    %221 = arith.addf %219, %220 : vector<16x32xf32>
    %cst_60 = arith.constant dense<0.000000e+00> : vector<16xf32>
    %222 = vector.multi_reduction <add>, %221, %cst_60 [1] : vector<16x32xf32> to vector<16xf32>
    %223 = vector.shape_cast %222 : vector<16xf32> to vector<16x1xf32>
    %cst_61 = arith.constant 3.200000e+01 : f32
    %224 = vector.broadcast %cst_61 : f32 to vector<16x1xf32>
    %225 = arith.divf %223, %224 : vector<16x1xf32>
    %226 = vector.broadcast %225 : vector<16x1xf32> to vector<16x32xf32>
    %227 = arith.subf %221, %226 : vector<16x32xf32>
    %228 = arith.mulf %227, %227 : vector<16x32xf32>
    %cst_62 = arith.constant dense<0.000000e+00> : vector<16xf32>
    %229 = vector.multi_reduction <add>, %228, %cst_62 [1] : vector<16x32xf32> to vector<16xf32>
    %230 = vector.shape_cast %229 : vector<16xf32> to vector<16x1xf32>
    %cst_63 = arith.constant 3.200000e+01 : f32
    %231 = vector.broadcast %cst_63 : f32 to vector<16x1xf32>
    %232 = arith.divf %230, %231 : vector<16x1xf32>
    %233 = vector.broadcast %225 : vector<16x1xf32> to vector<16x32xf32>
    %234 = arith.subf %221, %233 : vector<16x32xf32>
    %cst_64 = arith.constant 9.99999997E-7 : f32
    %235 = vector.broadcast %cst_64 : f32 to vector<16x1xf32>
    %236 = arith.addf %232, %235 : vector<16x1xf32>
    %237 = math.rsqrt %236 : vector<16x1xf32>
    %238 = vector.broadcast %237 : vector<16x1xf32> to vector<16x32xf32>
    %239 = arith.mulf %234, %238 : vector<16x32xf32>
    %240 = vector.broadcast %6 : vector<1x32xf32> to vector<16x32xf32>
    %241 = arith.mulf %239, %240 : vector<16x32xf32>
    %242 = vector.broadcast %7 : vector<1x32xf32> to vector<16x32xf32>
    %243 = arith.addf %241, %242 : vector<16x32xf32>
    %c0_65 = arith.constant 0 : index
    %c0_66 = arith.constant 0 : index
    %244 = vector.load %arg4[%c0_65, %c0_66] : memref<32x64xf32, #tpu.memory_space<vmem>>, vector<32x64xf32>
    %cst_67 = arith.constant dense<0.000000e+00> : vector<16x64xf32>
    %245 = tpu.matmul %243, %244, %cst_67 {dimension_numbers = #tpu.dot_dimension_numbers<[1], [0], [0], [1], [0, 0, 1, 1], [], []>} : vector<16x32xf32>, vector<32x64xf32>, vector<16x64xf32> -> vector<16x64xf32>
    %246 = vector.broadcast %8 : vector<1x64xf32> to vector<16x64xf32>
    %247 = arith.addf %245, %246 : vector<16x64xf32>
    %cst_68 = arith.constant 0.000000e+00 : f32
    %248 = vector.broadcast %cst_68 : f32 to vector<16x64xf32>
    %249 = arith.maximumf %247, %248 : vector<16x64xf32>
    %c0_69 = arith.constant 0 : index
    %c0_70 = arith.constant 0 : index
    %250 = vector.load %arg5[%c0_69, %c0_70] : memref<64x32xf32, #tpu.memory_space<vmem>>, vector<64x32xf32>
    %cst_71 = arith.constant dense<0.000000e+00> : vector<16x32xf32>
    %251 = tpu.matmul %249, %250, %cst_71 {dimension_numbers = #tpu.dot_dimension_numbers<[1], [0], [0], [1], [0, 0, 1, 1], [], []>} : vector<16x64xf32>, vector<64x32xf32>, vector<16x32xf32> -> vector<16x32xf32>
    %252 = vector.broadcast %9 : vector<1x32xf32> to vector<16x32xf32>
    %253 = arith.addf %251, %252 : vector<16x32xf32>
    %254 = arith.addf %253, %221 : vector<16x32xf32>
    %c0_72 = arith.constant 0 : index
    %c0_73 = arith.constant 0 : index
    %255 = vector.load %arg7[%c0_72, %c0_73] : memref<16x32xf32, #tpu.memory_space<vmem>>, vector<16x32xf32>
    tpu.vector_store %arg7[%c0_72, %c0_73], %254 {strides = array<i32>} : memref<16x32xf32, #tpu.memory_space<vmem>>, vector<16x32xf32>,
    return
  }
}

</mosaic_0001>

<llo_original>
// kernel: tpu_custom_call.1
$region0: #{tpu_custom_call.1}
  #allocation0 [shape = 'u32[]', space=smem, size = 0x4, offset = 0x4, fixed_abs, tag = 'smem constant byte address 0x4 - core index']
  #allocation1 [shape = 'u32[144,128]{1,0:T(1,128)}', space=vmem, size = 0x12000, scoped, tag = 'internal scratch']
  %s0 = inlined_call_operand.hbm [shape: f32[16,32], index: 0, kind: input, shape index: {}]
  %s1 = inlined_call_operand.hbm [shape: f32[2,8,8], index: 1, kind: input, shape index: {}]
  %s2 = inlined_call_operand.vmem [shape: f32[32,96], index: 2, kind: input, shape index: {}]
  %s3 = inlined_call_operand.vmem [shape: f32[32,32], index: 3, kind: input, shape index: {}]
  %s4 = inlined_call_operand.vmem [shape: f32[32,64], index: 4, kind: input, shape index: {}]
  %s5 = inlined_call_operand.vmem [shape: f32[64,32], index: 5, kind: input, shape index: {}]
  %s6 = inlined_call_operand.vmem [shape: f32[8,96], index: 6, kind: input, shape index: {}]
  %s7 = inlined_call_operand.hbm [shape: f32[16,32], index: 7, kind: output, shape index: {0}]
  %s8 = inlined_call_operand.hbm [shape: f32[16,32], index: 8, kind: output, shape index: {1}]
  %9 = xla_tuple %s7, %s8
  %s10 = sld [smem:[#allocation0]]
  $region54: #{tpu_custom_call.1} parent=0
    _
  %s12 = ssub.s32 1, %s10
  %s13 = scalar_select 0, %s12, %s10
  $region1: #{tpu_custom_call.1} parent=0
    #allocation2 [shape = 'u8[8192]{0}', space=vmem, size = 0x2000, scoped, tag = 'input window, operand 0, single buffered']
    #allocation3 [shape = 's32[1]{0}', space=sflag, size = 0x4, scoped, tag = 'scoped memory for tpu_custom_call.1']
    #allocation4 [shape = 's32[1]{0}', space=sflag, size = 0x4, scoped, tag = 'scoped memory for tpu_custom_call.1']
    #allocation5 [shape = 'u8[8192]{0}', space=vmem, size = 0x2000, scoped, tag = 'input window, operand 1, single buffered']
    #allocation6 [shape = 's32[1]{0}', space=sflag, size = 0x4, scoped, tag = 'scoped memory for tpu_custom_call.1']
    #allocation7 [shape = 'u8[8192]{0}', space=vmem, size = 0x2000, scoped, tag = 'output window, operand 0, single buffered']
    #allocation8 [shape = 'u8[8192]{0}', space=vmem, size = 0x2000, scoped, tag = 'output window, operand 1, single buffered']
    #allocation9 [shape = 's32[1]{0}', space=sflag, size = 0x4, scoped, tag = 'scoped memory for tpu_custom_call.1']
    %14 = vsyncpa [#allocation3], 0
    %15 = vsyncpa [#allocation6], 0
    %16 = vsyncpa [#allocation4], 0
    %17 = vsyncpa [#allocation9], 0
    // Predicated region
    $region2: #{tpu_custom_call.1} parent=1 // pred_check
      _
    $region3: #{tpu_custom_call.1} parent=1 // pred_check_branch
      %19 = sbr.rel (0) target = $region5
    $region4: #{tpu_custom_call.1} parent=1 // pred_region
      %s21 = ssub.s32 256, 256
      %22 = vsyncadd [#allocation3], %s21
      %s23 = sshll.u32 [#allocation2], 4
      %s24 = int_to_ptr.vmem [resolvable:$true] %s23
      %29 = dma.hbm_to_vmem [thread:$0]  %s0, 256, %s24, [#allocation3], 128, 128, 8
    $region5: #{tpu_custom_call.1} parent=1 // pred_fallthru
      _
    // Predicated region
    $region6: #{tpu_custom_call.1} parent=1 // pred_check
      _
    $region7: #{tpu_custom_call.1} parent=1 // pred_check_branch
      %31 = sbr.rel (0) target = $region9
    $region8: #{tpu_custom_call.1} parent=1 // pred_region
      %s33 = ssub.s32 256, 256
      %34 = vsyncadd [#allocation6], %s33
      %s35 = sshll.u32 [#allocation5], 4
      %s36 = int_to_ptr.vmem [resolvable:$true] %s35
      %41 = dma.hbm_to_vmem [thread:$0]  %s1, 256, %s36, [#allocation6], 128, 128, 8
    $region9: #{tpu_custom_call.1} parent=1 // pred_fallthru
      _
    // Predicated region
    $region10: #{tpu_custom_call.1} parent=1 // pred_check
      _
    $region11: #{tpu_custom_call.1} parent=1 // pred_check_branch
      %43 = sbr.rel (0) target = $region13
    $region12: #{tpu_custom_call.1} parent=1 // pred_region
      _
    $region13: #{tpu_custom_call.1} parent=1 // pred_fallthru
      _
    // Predicated region
    $region14: #{tpu_custom_call.1} parent=1 // pred_check
      _
    $region15: #{tpu_custom_call.1} parent=1 // pred_check_branch
      %45 = sbr.rel (0) target = $region17
    $region16: #{tpu_custom_call.1} parent=1 // pred_region
      _
    $region17: #{tpu_custom_call.1} parent=1 // pred_fallthru
      _
    // Predicated region
    $region18: #{tpu_custom_call.1} parent=1 // pred_check
      _
    $region19: #{tpu_custom_call.1} parent=1 // pred_check_branch
      %47 = sbr.rel (0) target = $region21
    $region20: #{tpu_custom_call.1} parent=1 // pred_region
      _
    $region21: #{tpu_custom_call.1} parent=1 // pred_fallthru
      _
    // Predicated region
    $region22: #{tpu_custom_call.1} parent=1 // pred_check
      _
    $region23: #{tpu_custom_call.1} parent=1 // pred_check_branch
      %49 = sbr.rel (0) target = $region25
    $region24: #{tpu_custom_call.1} parent=1 // pred_region
      _
    $region25: #{tpu_custom_call.1} parent=1 // pred_fallthru
      _
    // Predicated region
    $region26: #{tpu_custom_call.1} parent=1 // pred_check
      _
    $region27: #{tpu_custom_call.1} parent=1 // pred_check_branch
      %51 = sbr.rel (0) target = $region29
    $region28: #{tpu_custom_call.1} parent=1 // pred_region
      _
    $region29: #{tpu_custom_call.1} parent=1 // pred_fallthru
      _
    // Predicated region
    $region30: #{tpu_custom_call.1} parent=1 // pred_check
      _
    $region31: #{tpu_custom_call.1} parent=1 // pred_check_branch
      %53 = sbr.rel (0) target = $region33
    $region32: #{tpu_custom_call.1} parent=1 // pred_region
      %54 = dma.done [#allocation3], 256
    $region33: #{tpu_custom_call.1} parent=1 // pred_fallthru
      _
    // Predicated region
    $region34: #{tpu_custom_call.1} parent=1 // pred_check
      _
    $region35: #{tpu_custom_call.1} parent=1 // pred_check_branch
      %56 = sbr.rel (0) target = $region37
    $region36: #{tpu_custom_call.1} parent=1 // pred_region
      %57 = dma.done [#allocation6], 256
    $region37: #{tpu_custom_call.1} parent=1 // pred_fallthru
      _
    %v58 = vld [vmem:[#allocation2] sm:$0xff]
    %v59 = vld [vmem:[#allocation2 + $0x8] sm:$0xff]
    %v60 = vld [vmem:[%s6] sm:$0xff]
    %v61 = vld [vmem:[%s2] sm:$0xff]
    %v62 = vld [vmem:[%s2 + $0x8] sm:$0xff]
    %v63 = vld [vmem:[%s2 + $0x10] sm:$0xff]
    %v64 = vld [vmem:[%s2 + $0x18] sm:$0xff]
    %v65 = vlaneseq
    %v66 = vshrl.u32 %v65, 7
    %v67 = vsub.s32 0, %v66
    %v68 = vrot.slane %v60, %v67
    %vm69 = vcmask 261120
    %v71 = vsel %vm69, %v58, 0
    %v74 = vsel %vm69, %v59, 0
    %76 = vmatprep.subr.mxu0 0.0
    %77 = vmatpush1.msra.mxu0 %v61
    %78 = vmatprep.subr.mxu0 0.0
    %79 = vmatpush1.msra.mxu0 %v62
    %80 = vmatprep.subr.mxu0 0.0
    %81 = vmatpush1.msra.mxu0 %v63
    %82 = vmatprep.subr.mxu0 0.0
    %83 = vmatpush1.msra.mxu0 %v64
    %84 = vmatprep.subr.mxu0 0.0
    %85 = vmatpush1.msra.mxu0 0.0
    %86 = vmatprep.subr.mxu0 0.0
    %87 = vmatpush1.msra.mxu0 0.0
    %88 = vmatprep.subr.mxu0 0.0
    %89 = vmatpush1.msra.mxu0 0.0
    %90 = vmatprep.subr.mxu0 0.0
    %91 = vmatpush1.msra.mxu0 0.0
    %92 = vmatprep.subr.mxu0 0.0
    %93 = vmatpush1.msra.mxu0 0.0
    %94 = vmatprep.subr.mxu0 0.0
    %95 = vmatpush1.msra.mxu0 0.0
    %96 = vmatprep.subr.mxu0 0.0
    %97 = vmatpush1.msra.mxu0 0.0
    %98 = vmatprep.subr.mxu0 0.0
    %99 = vmatpush1.msra.mxu0 0.0
    %100 = vmatprep.subr.mxu0 0.0
    %101 = vmatpush1.msra.mxu0 0.0
    %102 = vmatprep.subr.mxu0 0.0
    %103 = vmatpush1.msra.mxu0 0.0
    %104 = vmatprep.subr.mxu0 0.0
    %105 = vmatpush1.msra.mxu0 0.0
    %106 = vmatprep.subr.mxu0 0.0
    %107 = vmatpush1.msra.mxu0 0.0
    %108 = vmatprep.subr.mxu0 0.0
    %109 = vmatpush1.msra.mxu0 0.0
    %110 = vmatprep.subr.mxu0 0.0
    %111 = vmatpush1.msra.mxu0 0.0
    %112 = vmatprep.subr.mxu0 0.0
    %113 = vmatpush1.msra.mxu0 0.0
    %114 = vmatprep.subr.mxu0 0.0
    %115 = vmatpush1.msra.mxu0 0.0
    %116 = vmatprep.subr.mxu0 0.0
    %117 = vmatpush1.msra.mxu0 0.0
    %118 = vmatprep.subr.mxu0 0.0
    %119 = vmatpush1.msra.mxu0 0.0
    %120 = vmatprep.subr.mxu0 0.0
    %121 = vmatpush1.msra.mxu0 0.0
    %122 = vmatprep.subr.mxu0 0.0
    %123 = vmatpush1.msra.mxu0 0.0
    %124 = vmatprep.subr.mxu0 0.0
    %125 = vmatpush1.msra.mxu0 0.0
    %126 = vmatprep.subr.mxu0 0.0
    %127 = vmatpush1.msra.mxu0 0.0
    %128 = vmatprep.subr.mxu0 0.0
    %129 = vmatpush1.msra.mxu0 0.0
    %130 = vmatprep.subr.mxu0 0.0
    %131 = vmatpush1.msra.mxu0 0.0
    %132 = vmatprep.subr.mxu0 0.0
    %133 = vmatpush1.msra.mxu0 0.0
    %134 = vmatprep.subr.mxu0 0.0
    %135 = vmatpush1.msra.mxu0 0.0
    %136 = vmatprep.subr.mxu0 0.0
    %137 = vmatpush1.msra.mxu0 0.0
    %138 = vmatprep.subr.mxu0 0.0
    %139 = vmatpush1.msra.mxu0 0.0
    %140 = vmatprep.mubr.f32.mxu0 0.0
    %141 = vmatmul.mubr.f32.gmra.mrb[0].mxu0 %v71
    %v142 = vpop.f32.mrb[0].mxu0
    %v143 = vadd.f32 %v68, %v142
    %v144 = vpop.f32.mrb[0].mxu0
    %145 = vmatprep.mubr.f32.mxu0 0.0
    %146 = vmatmul.mubr.f32.gmra.mrb[0].mxu0 %v74
    %v147 = vpop.f32.mrb[0].mxu0
    %v148 = vadd.f32 %v68, %v147
    %v149 = vpop.f32.mrb[0].mxu0
    %150 = vdwg.mxu0
    %v151 = vld [vmem:[#allocation5] sm:$0xff]
    %153 = vrot.lane.b32.xlu0 %v143, 96
    %v154 = vpop.permute.xlu0 %153
    %vm155 = vcmask 64512
    %v156 = vsel %vm155, %v143, 0
    %v158 = vsel %vm155, %v154, 0
    %160 = vmatprep.subr.mxu0 0.0
    %161 = vmatpush1.xpose.msra.mxu0 %v158
    %162 = vmatprep.subr.mxu0 0.0
    %163 = vmatpush1.xpose.msra.mxu0 0.0
    %164 = vmatprep.subr.mxu0 0.0
    %165 = vmatpush1.xpose.msra.mxu0 0.0
    %166 = vmatprep.subr.mxu0 0.0
    %167 = vmatpush1.xpose.msra.mxu0 0.0
    %168 = vmatprep.subr.mxu0 0.0
    %169 = vmatpush1.xpose.msra.mxu0 0.0
    %170 = vmatprep.subr.mxu0 0.0
    %171 = vmatpush1.xpose.msra.mxu0 0.0
    %172 = vmatprep.subr.mxu0 0.0
    %173 = vmatpush1.xpose.msra.mxu0 0.0
    %174 = vmatprep.subr.mxu0 0.0
    %175 = vmatpush1.xpose.msra.mxu0 0.0
    %176 = vmatprep.subr.mxu0 0.0
    %177 = vmatpush1.xpose.msra.mxu0 0.0
    %178 = vmatprep.subr.mxu0 0.0
    %179 = vmatpush1.xpose.msra.mxu0 0.0
    %180 = vmatprep.subr.mxu0 0.0
    %181 = vmatpush1.xpose.msra.mxu0 0.0
    %182 = vmatprep.subr.mxu0 0.0
    %183 = vmatpush1.xpose.msra.mxu0 0.0
    %184 = vmatprep.subr.mxu0 0.0
    %185 = vmatpush1.xpose.msra.mxu0 0.0
    %186 = vmatprep.subr.mxu0 0.0
    %187 = vmatpush1.xpose.msra.mxu0 0.0
    %188 = vmatprep.subr.mxu0 0.0
    %189 = vmatpush1.xpose.msra.mxu0 0.0
    %190 = vmatprep.subr.mxu0 0.0
    %191 = vmatpush1.xpose.msra.mxu0 0.0
    %192 = vmatprep.subr.mxu0 0.0
    %193 = vmatpush1.xpose.msra.mxu0 0.0
    %194 = vmatprep.subr.mxu0 0.0
    %195 = vmatpush1.xpose.msra.mxu0 0.0
    %196 = vmatprep.subr.mxu0 0.0
    %197 = vmatpush1.xpose.msra.mxu0 0.0
    %198 = vmatprep.subr.mxu0 0.0
    %199 = vmatpush1.xpose.msra.mxu0 0.0
    %200 = vmatprep.subr.mxu0 0.0
    %201 = vmatpush1.xpose.msra.mxu0 0.0
    %202 = vmatprep.subr.mxu0 0.0
    %203 = vmatpush1.xpose.msra.mxu0 0.0
    %204 = vmatprep.subr.mxu0 0.0
    %205 = vmatpush1.xpose.msra.mxu0 0.0
    %206 = vmatprep.subr.mxu0 0.0
    %207 = vmatpush1.xpose.msra.mxu0 0.0
    %208 = vmatprep.subr.mxu0 0.0
    %209 = vmatpush1.xpose.msra.mxu0 0.0
    %210 = vmatprep.subr.mxu0 0.0
    %211 = vmatpush1.xpose.msra.mxu0 0.0
    %212 = vmatprep.subr.mxu0 0.0
    %213 = vmatpush1.xpose.msra.mxu0 0.0
    %214 = vmatprep.subr.mxu0 0.0
    %215 = vmatpush1.xpose.msra.mxu0 0.0
    %216 = vmatprep.subr.mxu0 0.0
    %217 = vmatpush1.xpose.msra.mxu0 0.0
    %218 = vmatprep.subr.mxu0 0.0
    %219 = vmatpush1.xpose.msra.mxu0 0.0
    %220 = vmatprep.subr.mxu0 0.0
    %221 = vmatpush1.xpose.msra.mxu0 0.0
    %222 = vmatprep.subr.mxu0 0.0
    %223 = vmatpush1.xpose.msra.mxu0 0.0
    %224 = vmatprep.mubr.f32.mxu0 0.0
    %225 = vmatmul.mubr.f32.gmra.mrb[0].mxu0 %v156
    %v226 = vpop.f32.mrb[0].mxu0
    %v227 = vadd.f32 %v151, %v226
    %v228 = vpop.f32.mrb[0].mxu0
    %229 = vdwg.mxu0
    %v230 = vsel %vm155, %v227, -inf
    %231 = vmax.xlane.f32.xlu0 %v230
    %v232 = vpop.xlane.xlu0 %231
    %v233 = vsub.f32 %v227, %v232
    %v234 = vmul.f32 %v233, 1.442695
    %v235 = vpow.pop %v234
    %v236 = vsel %vm155, %v235, 0.0
    %237 = vadd.xlane.f32.xlu0 %v236
    %v238 = vpop.xlane.xlu0 %237
    %v239 = vrcp.pop %v238
    %v240 = vmul.f32 %v238, %v239
    %v241 = vsub.f32 2.0, %v240
    %v242 = vmul.f32 %v239, %v241
    %v243 = vmul.f32 %v235, %v242
    %244 = vrot.lane.b32.xlu0 %v143, 64
    %v245 = vpop.permute.xlu0 %244
    %v248 = vsel %vm155, %v243, 0
    %250 = vmatprep.subr.mxu0 0.0
    %251 = vmatpush1.msra.mxu0 %v245
    %252 = vmatprep.subr.mxu0 0.0
    %253 = vmatpush1.msra.mxu0 0.0
    %254 = vmatprep.subr.mxu0 0.0
    %255 = vmatpush1.msra.mxu0 0.0
    %256 = vmatprep.subr.mxu0 0.0
    %257 = vmatpush1.msra.mxu0 0.0
    %258 = vmatprep.subr.mxu0 0.0
    %259 = vmatpush1.msra.mxu0 0.0
    %260 = vmatprep.subr.mxu0 0.0
    %261 = vmatpush1.msra.mxu0 0.0
    %262 = vmatprep.subr.mxu0 0.0
    %263 = vmatpush1.msra.mxu0 0.0
    %264 = vmatprep.subr.mxu0 0.0
    %265 = vmatpush1.msra.mxu0 0.0
    %266 = vmatprep.subr.mxu0 0.0
    %267 = vmatpush1.msra.mxu0 0.0
    %268 = vmatprep.subr.mxu0 0.0
    %269 = vmatpush1.msra.mxu0 0.0
    %270 = vmatprep.subr.mxu0 0.0
    %271 = vmatpush1.msra.mxu0 0.0
    %272 = vmatprep.subr.mxu0 0.0
    %273 = vmatpush1.msra.mxu0 0.0
    %274 = vmatprep.subr.mxu0 0.0
    %275 = vmatpush1.msra.mxu0 0.0
    %276 = vmatprep.subr.mxu0 0.0
    %277 = vmatpush1.msra.mxu0 0.0
    %278 = vmatprep.subr.mxu0 0.0
    %279 = vmatpush1.msra.mxu0 0.0
    %280 = vmatprep.subr.mxu0 0.0
    %281 = vmatpush1.msra.mxu0 0.0
    %282 = vmatprep.subr.mxu0 0.0
    %283 = vmatpush1.msra.mxu0 0.0
    %284 = vmatprep.subr.mxu0 0.0
    %285 = vmatpush1.msra.mxu0 0.0
    %286 = vmatprep.subr.mxu0 0.0
    %287 = vmatpush1.msra.mxu0 0.0
    %288 = vmatprep.subr.mxu0 0.0
    %289 = vmatpush1.msra.mxu0 0.0
    %290 = vmatprep.subr.mxu0 0.0
    %291 = vmatpush1.msra.mxu0 0.0
    %292 = vmatprep.subr.mxu0 0.0
    %293 = vmatpush1.msra.mxu0 0.0
    %294 = vmatprep.subr.mxu0 0.0
    %295 = vmatpush1.msra.mxu0 0.0
    %296 = vmatprep.subr.mxu0 0.0
    %297 = vmatpush1.msra.mxu0 0.0
    %298 = vmatprep.subr.mxu0 0.0
    %299 = vmatpush1.msra.mxu0 0.0
    %300 = vmatprep.subr.mxu0 0.0
    %301 = vmatpush1.msra.mxu0 0.0
    %302 = vmatprep.subr.mxu0 0.0
    %303 = vmatpush1.msra.mxu0 0.0
    %304 = vmatprep.subr.mxu0 0.0
    %305 = vmatpush1.msra.mxu0 0.0
    %306 = vmatprep.subr.mxu0 0.0
    %307 = vmatpush1.msra.mxu0 0.0
    %308 = vmatprep.subr.mxu0 0.0
    %309 = vmatpush1.msra.mxu0 0.0
    %310 = vmatprep.subr.mxu0 0.0
    %311 = vmatpush1.msra.mxu0 0.0
    %312 = vmatprep.subr.mxu0 0.0
    %313 = vmatpush1.msra.mxu0 0.0
    %314 = vmatprep.mubr.f32.mxu0 0.0
    %315 = vmatmul.mubr.f32.gmra.mrb[0].mxu0 %v248
    %v316 = vpop.f32.mrb[0].mxu0
    %v317 = vadd.f32 0.0, %v316
    %v318 = vpop.f32.mrb[0].mxu0
    %319 = vdwg.mxu0
    %320 = vrot.lane.b32.xlu0 %v143, 120
    %v321 = vpop.permute.xlu0 %320
    %322 = vrot.lane.b32.xlu0 %v143, 88
    %v323 = vpop.permute.xlu0 %322
    %v324 = vsel %vm155, %v321, 0
    %v326 = vsel %vm155, %v323, 0
    %328 = vmatprep.subr.mxu0 0.0
    %329 = vmatpush1.xpose.msra.mxu0 %v326
    %330 = vmatprep.subr.mxu0 0.0
    %331 = vmatpush1.xpose.msra.mxu0 0.0
    %332 = vmatprep.subr.mxu0 0.0
    %333 = vmatpush1.xpose.msra.mxu0 0.0
    %334 = vmatprep.subr.mxu0 0.0
    %335 = vmatpush1.xpose.msra.mxu0 0.0
    %336 = vmatprep.subr.mxu0 0.0
    %337 = vmatpush1.xpose.msra.mxu0 0.0
    %338 = vmatprep.subr.mxu0 0.0
    %339 = vmatpush1.xpose.msra.mxu0 0.0
    %340 = vmatprep.subr.mxu0 0.0
    %341 = vmatpush1.xpose.msra.mxu0 0.0
    %342 = vmatprep.subr.mxu0 0.0
    %343 = vmatpush1.xpose.msra.mxu0 0.0
    %344 = vmatprep.subr.mxu0 0.0
    %345 = vmatpush1.xpose.msra.mxu0 0.0
    %346 = vmatprep.subr.mxu0 0.0
    %347 = vmatpush1.xpose.msra.mxu0 0.0
    %348 = vmatprep.subr.mxu0 0.0
    %349 = vmatpush1.xpose.msra.mxu0 0.0
    %350 = vmatprep.subr.mxu0 0.0
    %351 = vmatpush1.xpose.msra.mxu0 0.0
    %352 = vmatprep.subr.mxu0 0.0
    %353 = vmatpush1.xpose.msra.mxu0 0.0
    %354 = vmatprep.subr.mxu0 0.0
    %355 = vmatpush1.xpose.msra.mxu0 0.0
    %356 = vmatprep.subr.mxu0 0.0
    %357 = vmatpush1.xpose.msra.mxu0 0.0
    %358 = vmatprep.subr.mxu0 0.0
    %359 = vmatpush1.xpose.msra.mxu0 0.0
    %360 = vmatprep.subr.mxu0 0.0
    %361 = vmatpush1.xpose.msra.mxu0 0.0
    %362 = vmatprep.subr.mxu0 0.0
    %363 = vmatpush1.xpose.msra.mxu0 0.0
    %364 = vmatprep.subr.mxu0 0.0
    %365 = vmatpush1.xpose.msra.mxu0 0.0
    %366 = vmatprep.subr.mxu0 0.0
    %367 = vmatpush1.xpose.msra.mxu0 0.0
    %368 = vmatprep.subr.mxu0 0.0
    %369 = vmatpush1.xpose.msra.mxu0 0.0
    %370 = vmatprep.subr.mxu0 0.0
    %371 = vmatpush1.xpose.msra.mxu0 0.0
    %372 = vmatprep.subr.mxu0 0.0
    %373 = vmatpush1.xpose.msra.mxu0 0.0
    %374 = vmatprep.subr.mxu0 0.0
    %375 = vmatpush1.xpose.msra.mxu0 0.0
    %376 = vmatprep.subr.mxu0 0.0
    %377 = vmatpush1.xpose.msra.mxu0 0.0
    %378 = vmatprep.subr.mxu0 0.0
    %379 = vmatpush1.xpose.msra.mxu0 0.0
    %380 = vmatprep.subr.mxu0 0.0
    %381 = vmatpush1.xpose.msra.mxu0 0.0
    %382 = vmatprep.subr.mxu0 0.0
    %383 = vmatpush1.xpose.msra.mxu0 0.0
    %384 = vmatprep.subr.mxu0 0.0
    %385 = vmatpush1.xpose.msra.mxu0 0.0
    %386 = vmatprep.subr.mxu0 0.0
    %387 = vmatpush1.xpose.msra.mxu0 0.0
    %388 = vmatprep.subr.mxu0 0.0
    %389 = vmatpush1.xpose.msra.mxu0 0.0
    %390 = vmatprep.subr.mxu0 0.0
    %391 = vmatpush1.xpose.msra.mxu0 0.0
    %392 = vmatprep.mubr.f32.mxu0 0.0
    %393 = vmatmul.mubr.f32.gmra.mrb[0].mxu0 %v324
    %v394 = vpop.f32.mrb[0].mxu0
    %v395 = vadd.f32 %v151, %v394
    %v396 = vpop.f32.mrb[0].mxu0
    %397 = vdwg.mxu0
    %v398 = vsel %vm155, %v395, -inf
    %399 = vmax.xlane.f32.xlu0 %v398
    %v400 = vpop.xlane.xlu0 %399
    %v401 = vsub.f32 %v395, %v400
    %v402 = vmul.f32 %v401, 1.442695
    %v403 = vpow.pop %v402
    %v404 = vsel %vm155, %v403, 0.0
    %405 = vadd.xlane.f32.xlu0 %v404
    %v406 = vpop.xlane.xlu0 %405
    %v407 = vrcp.pop %v406
    %v408 = vmul.f32 %v406, %v407
    %v409 = vsub.f32 2.0, %v408
    %v410 = vmul.f32 %v407, %v409
    %v411 = vmul.f32 %v403, %v410
    %412 = vrot.lane.b32.xlu0 %v143, 56
    %v413 = vpop.permute.xlu0 %412
    %v416 = vsel %vm155, %v411, 0
    %418 = vmatprep.subr.mxu0 0.0
    %419 = vmatpush1.msra.mxu0 %v413
    %420 = vmatprep.subr.mxu0 0.0
    %421 = vmatpush1.msra.mxu0 0.0
    %422 = vmatprep.subr.mxu0 0.0
    %423 = vmatpush1.msra.mxu0 0.0
    %424 = vmatprep.subr.mxu0 0.0
    %425 = vmatpush1.msra.mxu0 0.0
    %426 = vmatprep.subr.mxu0 0.0
    %427 = vmatpush1.msra.mxu0 0.0
    %428 = vmatprep.subr.mxu0 0.0
    %429 = vmatpush1.msra.mxu0 0.0
    %430 = vmatprep.subr.mxu0 0.0
    %431 = vmatpush1.msra.mxu0 0.0
    %432 = vmatprep.subr.mxu0 0.0
    %433 = vmatpush1.msra.mxu0 0.0
    %434 = vmatprep.subr.mxu0 0.0
    %435 = vmatpush1.msra.mxu0 0.0
    %436 = vmatprep.subr.mxu0 0.0
    %437 = vmatpush1.msra.mxu0 0.0
    %438 = vmatprep.subr.mxu0 0.0
    %439 = vmatpush1.msra.mxu0 0.0
    %440 = vmatprep.subr.mxu0 0.0
    %441 = vmatpush1.msra.mxu0 0.0
    %442 = vmatprep.subr.mxu0 0.0
    %443 = vmatpush1.msra.mxu0 0.0
    %444 = vmatprep.subr.mxu0 0.0
    %445 = vmatpush1.msra.mxu0 0.0
    %446 = vmatprep.subr.mxu0 0.0
    %447 = vmatpush1.msra.mxu0 0.0
    %448 = vmatprep.subr.mxu0 0.0
    %449 = vmatpush1.msra.mxu0 0.0
    %450 = vmatprep.subr.mxu0 0.0
    %451 = vmatpush1.msra.mxu0 0.0
    %452 = vmatprep.subr.mxu0 0.0
    %453 = vmatpush1.msra.mxu0 0.0
    %454 = vmatprep.subr.mxu0 0.0
    %455 = vmatpush1.msra.mxu0 0.0
    %456 = vmatprep.subr.mxu0 0.0
    %457 = vmatpush1.msra.mxu0 0.0
    %458 = vmatprep.subr.mxu0 0.0
    %459 = vmatpush1.msra.mxu0 0.0
    %460 = vmatprep.subr.mxu0 0.0
    %461 = vmatpush1.msra.mxu0 0.0
    %462 = vmatprep.subr.mxu0 0.0
    %463 = vmatpush1.msra.mxu0 0.0
    %464 = vmatprep.subr.mxu0 0.0
    %465 = vmatpush1.msra.mxu0 0.0
    %466 = vmatprep.subr.mxu0 0.0
    %467 = vmatpush1.msra.mxu0 0.0
    %468 = vmatprep.subr.mxu0 0.0
    %469 = vmatpush1.msra.mxu0 0.0
    %470 = vmatprep.subr.mxu0 0.0
    %471 = vmatpush1.msra.mxu0 0.0
    %472 = vmatprep.subr.mxu0 0.0
    %473 = vmatpush1.msra.mxu0 0.0
    %474 = vmatprep.subr.mxu0 0.0
    %475 = vmatpush1.msra.mxu0 0.0
    %476 = vmatprep.subr.mxu0 0.0
    %477 = vmatpush1.msra.mxu0 0.0
    %478 = vmatprep.subr.mxu0 0.0
    %479 = vmatpush1.msra.mxu0 0.0
    %480 = vmatprep.subr.mxu0 0.0
    %481 = vmatpush1.msra.mxu0 0.0
    %482 = vmatprep.mubr.f32.mxu0 0.0
    %483 = vmatmul.mubr.f32.gmra.mrb[0].mxu0 %v416
    %v484 = vpop.f32.mrb[0].mxu0
    %v485 = vadd.f32 0.0, %v484
    %v486 = vpop.f32.mrb[0].mxu0
    %487 = vdwg.mxu0
    %488 = vrot.lane.b32.xlu0 %v143, 112
    %v489 = vpop.permute.xlu0 %488
    %490 = vrot.lane.b32.xlu0 %v143, 80
    %v491 = vpop.permute.xlu0 %490
    %v492 = vsel %vm155, %v489, 0
    %v494 = vsel %vm155, %v491, 0
    %496 = vmatprep.subr.mxu0 0.0
    %497 = vmatpush1.xpose.msra.mxu0 %v494
    %498 = vmatprep.subr.mxu0 0.0
    %499 = vmatpush1.xpose.msra.mxu0 0.0
    %500 = vmatprep.subr.mxu0 0.0
    %501 = vmatpush1.xpose.msra.mxu0 0.0
    %502 = vmatprep.subr.mxu0 0.0
    %503 = vmatpush1.xpose.msra.mxu0 0.0
    %504 = vmatprep.subr.mxu0 0.0
    %505 = vmatpush1.xpose.msra.mxu0 0.0
    %506 = vmatprep.subr.mxu0 0.0
    %507 = vmatpush1.xpose.msra.mxu0 0.0
    %508 = vmatprep.subr.mxu0 0.0
    %509 = vmatpush1.xpose.msra.mxu0 0.0
    %510 = vmatprep.subr.mxu0 0.0
    %511 = vmatpush1.xpose.msra.mxu0 0.0
    %512 = vmatprep.subr.mxu0 0.0
    %513 = vmatpush1.xpose.msra.mxu0 0.0
    %514 = vmatprep.subr.mxu0 0.0
    %515 = vmatpush1.xpose.msra.mxu0 0.0
    %516 = vmatprep.subr.mxu0 0.0
    %517 = vmatpush1.xpose.msra.mxu0 0.0
    %518 = vmatprep.subr.mxu0 0.0
    %519 = vmatpush1.xpose.msra.mxu0 0.0
    %520 = vmatprep.subr.mxu0 0.0
    %521 = vmatpush1.xpose.msra.mxu0 0.0
    %522 = vmatprep.subr.mxu0 0.0
    %523 = vmatpush1.xpose.msra.mxu0 0.0
    %524 = vmatprep.subr.mxu0 0.0
    %525 = vmatpush1.xpose.msra.mxu0 0.0
    %526 = vmatprep.subr.mxu0 0.0
    %527 = vmatpush1.xpose.msra.mxu0 0.0
    %528 = vmatprep.subr.mxu0 0.0
    %529 = vmatpush1.xpose.msra.mxu0 0.0
    %530 = vmatprep.subr.mxu0 0.0
    %531 = vmatpush1.xpose.msra.mxu0 0.0
    %532 = vmatprep.subr.mxu0 0.0
    %533 = vmatpush1.xpose.msra.mxu0 0.0
    %534 = vmatprep.subr.mxu0 0.0
    %535 = vmatpush1.xpose.msra.mxu0 0.0
    %536 = vmatprep.subr.mxu0 0.0
    %537 = vmatpush1.xpose.msra.mxu0 0.0
    %538 = vmatprep.subr.mxu0 0.0
    %539 = vmatpush1.xpose.msra.mxu0 0.0
    %540 = vmatprep.subr.mxu0 0.0
    %541 = vmatpush1.xpose.msra.mxu0 0.0
    %542 = vmatprep.subr.mxu0 0.0
    %543 = vmatpush1.xpose.msra.mxu0 0.0
    %544 = vmatprep.subr.mxu0 0.0
    %545 = vmatpush1.xpose.msra.mxu0 0.0
    %546 = vmatprep.subr.mxu0 0.0
    %547 = vmatpush1.xpose.msra.mxu0 0.0
    %548 = vmatprep.subr.mxu0 0.0
    %549 = vmatpush1.xpose.msra.mxu0 0.0
    %550 = vmatprep.subr.mxu0 0.0
    %551 = vmatpush1.xpose.msra.mxu0 0.0
    %552 = vmatprep.subr.mxu0 0.0
    %553 = vmatpush1.xpose.msra.mxu0 0.0
    %554 = vmatprep.subr.mxu0 0.0
    %555 = vmatpush1.xpose.msra.mxu0 0.0
    %556 = vmatprep.subr.mxu0 0.0
    %557 = vmatpush1.xpose.msra.mxu0 0.0
    %558 = vmatprep.subr.mxu0 0.0
    %559 = vmatpush1.xpose.msra.mxu0 0.0
    %560 = vmatprep.mubr.f32.mxu0 0.0
    %561 = vmatmul.mubr.f32.gmra.mrb[0].mxu0 %v492
    %v562 = vpop.f32.mrb[0].mxu0
    %v563 = vadd.f32 %v151, %v562
    %v564 = vpop.f32.mrb[0].mxu0
    %565 = vdwg.mxu0
    %v566 = vsel %vm155, %v563, -inf
    %567 = vmax.xlane.f32.xlu0 %v566
    %v568 = vpop.xlane.xlu0 %567
    %v569 = vsub.f32 %v563, %v568
    %v570 = vmul.f32 %v569, 1.442695
    %v571 = vpow.pop %v570
    %v572 = vsel %vm155, %v571, 0.0
    %573 = vadd.xlane.f32.xlu0 %v572
    %v574 = vpop.xlane.xlu0 %573
    %v575 = vrcp.pop %v574
    %v576 = vmul.f32 %v574, %v575
    %v577 = vsub.f32 2.0, %v576
    %v578 = vmul.f32 %v575, %v577
    %v579 = vmul.f32 %v571, %v578
    %580 = vrot.lane.b32.xlu0 %v143, 48
    %v581 = vpop.permute.xlu0 %580
    %v584 = vsel %vm155, %v579, 0
    %586 = vmatprep.subr.mxu0 0.0
    %587 = vmatpush1.msra.mxu0 %v581
    %588 = vmatprep.subr.mxu0 0.0
    %589 = vmatpush1.msra.mxu0 0.0
    %590 = vmatprep.subr.mxu0 0.0
    %591 = vmatpush1.msra.mxu0 0.0
    %592 = vmatprep.subr.mxu0 0.0
    %593 = vmatpush1.msra.mxu0 0.0
    %594 = vmatprep.subr.mxu0 0.0
    %595 = vmatpush1.msra.mxu0 0.0
    %596 = vmatprep.subr.mxu0 0.0
    %597 = vmatpush1.msra.mxu0 0.0
    %598 = vmatprep.subr.mxu0 0.0
    %599 = vmatpush1.msra.mxu0 0.0
    %600 = vmatprep.subr.mxu0 0.0
    %601 = vmatpush1.msra.mxu0 0.0
    %602 = vmatprep.subr.mxu0 0.0
    %603 = vmatpush1.msra.mxu0 0.0
    %604 = vmatprep.subr.mxu0 0.0
    %605 = vmatpush1.msra.mxu0 0.0
    %606 = vmatprep.subr.mxu0 0.0
    %607 = vmatpush1.msra.mxu0 0.0
    %608 = vmatprep.subr.mxu0 0.0
    %609 = vmatpush1.msra.mxu0 0.0
    %610 = vmatprep.subr.mxu0 0.0
    %611 = vmatpush1.msra.mxu0 0.0
    %612 = vmatprep.subr.mxu0 0.0
    %613 = vmatpush1.msra.mxu0 0.0
    %614 = vmatprep.subr.mxu0 0.0
    %615 = vmatpush1.msra.mxu0 0.0
    %616 = vmatprep.subr.mxu0 0.0
    %617 = vmatpush1.msra.mxu0 0.0
    %618 = vmatprep.subr.mxu0 0.0
    %619 = vmatpush1.msra.mxu0 0.0
    %620 = vmatprep.subr.mxu0 0.0
    %621 = vmatpush1.msra.mxu0 0.0
    %622 = vmatprep.subr.mxu0 0.0
    %623 = vmatpush1.msra.mxu0 0.0
    %624 = vmatprep.subr.mxu0 0.0
    %625 = vmatpush1.msra.mxu0 0.0
    %626 = vmatprep.subr.mxu0 0.0
    %627 = vmatpush1.msra.mxu0 0.0
    %628 = vmatprep.subr.mxu0 0.0
    %629 = vmatpush1.msra.mxu0 0.0
    %630 = vmatprep.subr.mxu0 0.0
    %631 = vmatpush1.msra.mxu0 0.0
    %632 = vmatprep.subr.mxu0 0.0
    %633 = vmatpush1.msra.mxu0 0.0
    %634 = vmatprep.subr.mxu0 0.0
    %635 = vmatpush1.msra.mxu0 0.0
    %636 = vmatprep.subr.mxu0 0.0
    %637 = vmatpush1.msra.mxu0 0.0
    %638 = vmatprep.subr.mxu0 0.0
    %639 = vmatpush1.msra.mxu0 0.0
    %640 = vmatprep.subr.mxu0 0.0
    %641 = vmatpush1.msra.mxu0 0.0
    %642 = vmatprep.subr.mxu0 0.0
    %643 = vmatpush1.msra.mxu0 0.0
    %644 = vmatprep.subr.mxu0 0.0
    %645 = vmatpush1.msra.mxu0 0.0
    %646 = vmatprep.subr.mxu0 0.0
    %647 = vmatpush1.msra.mxu0 0.0
    %648 = vmatprep.subr.mxu0 0.0
    %649 = vmatpush1.msra.mxu0 0.0
    %650 = vmatprep.mubr.f32.mxu0 0.0
    %651 = vmatmul.mubr.f32.gmra.mrb[0].mxu0 %v584
    %v652 = vpop.f32.mrb[0].mxu0
    %v653 = vadd.f32 0.0, %v652
    %v654 = vpop.f32.mrb[0].mxu0
    %655 = vdwg.mxu0
    %656 = vrot.lane.b32.xlu0 %v143, 104
    %v657 = vpop.permute.xlu0 %656
    %658 = vrot.lane.b32.xlu0 %v143, 72
    %v659 = vpop.permute.xlu0 %658
    %v660 = vsel %vm155, %v657, 0
    %v662 = vsel %vm155, %v659, 0
    %664 = vmatprep.subr.mxu0 0.0
    %665 = vmatpush1.xpose.msra.mxu0 %v662
    %666 = vmatprep.subr.mxu0 0.0
    %667 = vmatpush1.xpose.msra.mxu0 0.0
    %668 = vmatprep.subr.mxu0 0.0
    %669 = vmatpush1.xpose.msra.mxu0 0.0
    %670 = vmatprep.subr.mxu0 0.0
    %671 = vmatpush1.xpose.msra.mxu0 0.0
    %672 = vmatprep.subr.mxu0 0.0
    %673 = vmatpush1.xpose.msra.mxu0 0.0
    %674 = vmatprep.subr.mxu0 0.0
    %675 = vmatpush1.xpose.msra.mxu0 0.0
    %676 = vmatprep.subr.mxu0 0.0
    %677 = vmatpush1.xpose.msra.mxu0 0.0
    %678 = vmatprep.subr.mxu0 0.0
    %679 = vmatpush1.xpose.msra.mxu0 0.0
    %680 = vmatprep.subr.mxu0 0.0
    %681 = vmatpush1.xpose.msra.mxu0 0.0
    %682 = vmatprep.subr.mxu0 0.0
    %683 = vmatpush1.xpose.msra.mxu0 0.0
    %684 = vmatprep.subr.mxu0 0.0
    %685 = vmatpush1.xpose.msra.mxu0 0.0
    %686 = vmatprep.subr.mxu0 0.0
    %687 = vmatpush1.xpose.msra.mxu0 0.0
    %688 = vmatprep.subr.mxu0 0.0
    %689 = vmatpush1.xpose.msra.mxu0 0.0
    %690 = vmatprep.subr.mxu0 0.0
    %691 = vmatpush1.xpose.msra.mxu0 0.0
    %692 = vmatprep.subr.mxu0 0.0
    %693 = vmatpush1.xpose.msra.mxu0 0.0
    %694 = vmatprep.subr.mxu0 0.0
    %695 = vmatpush1.xpose.msra.mxu0 0.0
    %696 = vmatprep.subr.mxu0 0.0
    %697 = vmatpush1.xpose.msra.mxu0 0.0
    %698 = vmatprep.subr.mxu0 0.0
    %699 = vmatpush1.xpose.msra.mxu0 0.0
    %700 = vmatprep.subr.mxu0 0.0
    %701 = vmatpush1.xpose.msra.mxu0 0.0
    %702 = vmatprep.subr.mxu0 0.0
    %703 = vmatpush1.xpose.msra.mxu0 0.0
    %704 = vmatprep.subr.mxu0 0.0
    %705 = vmatpush1.xpose.msra.mxu0 0.0
    %706 = vmatprep.subr.mxu0 0.0
    %707 = vmatpush1.xpose.msra.mxu0 0.0
    %708 = vmatprep.subr.mxu0 0.0
    %709 = vmatpush1.xpose.msra.mxu0 0.0
    %710 = vmatprep.subr.mxu0 0.0
    %711 = vmatpush1.xpose.msra.mxu0 0.0
    %712 = vmatprep.subr.mxu0 0.0
    %713 = vmatpush1.xpose.msra.mxu0 0.0
    %714 = vmatprep.subr.mxu0 0.0
    %715 = vmatpush1.xpose.msra.mxu0 0.0
    %716 = vmatprep.subr.mxu0 0.0
    %717 = vmatpush1.xpose.msra.mxu0 0.0
    %718 = vmatprep.subr.mxu0 0.0
    %719 = vmatpush1.xpose.msra.mxu0 0.0
    %720 = vmatprep.subr.mxu0 0.0
    %721 = vmatpush1.xpose.msra.mxu0 0.0
    %722 = vmatprep.subr.mxu0 0.0
    %723 = vmatpush1.xpose.msra.mxu0 0.0
    %724 = vmatprep.subr.mxu0 0.0
    %725 = vmatpush1.xpose.msra.mxu0 0.0
    %726 = vmatprep.subr.mxu0 0.0
    %727 = vmatpush1.xpose.msra.mxu0 0.0
    %728 = vmatprep.mubr.f32.mxu0 0.0
    %729 = vmatmul.mubr.f32.gmra.mrb[0].mxu0 %v660
    %v730 = vpop.f32.mrb[0].mxu0
    %v731 = vadd.f32 %v151, %v730
    %v732 = vpop.f32.mrb[0].mxu0
    %733 = vdwg.mxu0
    %v734 = vsel %vm155, %v731, -inf
    %735 = vmax.xlane.f32.xlu0 %v734
    %v736 = vpop.xlane.xlu0 %735
    %v737 = vsub.f32 %v731, %v736
    %v738 = vmul.f32 %v737, 1.442695
    %v739 = vpow.pop %v738
    %v740 = vsel %vm155, %v739, 0.0
    %741 = vadd.xlane.f32.xlu0 %v740
    %v742 = vpop.xlane.xlu0 %741
    %v743 = vrcp.pop %v742
    %v744 = vmul.f32 %v742, %v743
    %v745 = vsub.f32 2.0, %v744
    %v746 = vmul.f32 %v743, %v745
    %v747 = vmul.f32 %v739, %v746
    %748 = vrot.lane.b32.xlu0 %v143, 40
    %v749 = vpop.permute.xlu0 %748
    %v752 = vsel %vm155, %v747, 0
    %754 = vmatprep.subr.mxu0 0.0
    %755 = vmatpush1.msra.mxu0 %v749
    %756 = vmatprep.subr.mxu0 0.0
    %757 = vmatpush1.msra.mxu0 0.0
    %758 = vmatprep.subr.mxu0 0.0
    %759 = vmatpush1.msra.mxu0 0.0
    %760 = vmatprep.subr.mxu0 0.0
    %761 = vmatpush1.msra.mxu0 0.0
    %762 = vmatprep.subr.mxu0 0.0
    %763 = vmatpush1.msra.mxu0 0.0
    %764 = vmatprep.subr.mxu0 0.0
    %765 = vmatpush1.msra.mxu0 0.0
    %766 = vmatprep.subr.mxu0 0.0
    %767 = vmatpush1.msra.mxu0 0.0
    %768 = vmatprep.subr.mxu0 0.0
    %769 = vmatpush1.msra.mxu0 0.0
    %770 = vmatprep.subr.mxu0 0.0
    %771 = vmatpush1.msra.mxu0 0.0
    %772 = vmatprep.subr.mxu0 0.0
    %773 = vmatpush1.msra.mxu0 0.0
    %774 = vmatprep.subr.mxu0 0.0
    %775 = vmatpush1.msra.mxu0 0.0
    %776 = vmatprep.subr.mxu0 0.0
    %777 = vmatpush1.msra.mxu0 0.0
    %778 = vmatprep.subr.mxu0 0.0
    %779 = vmatpush1.msra.mxu0 0.0
    %780 = vmatprep.subr.mxu0 0.0
    %781 = vmatpush1.msra.mxu0 0.0
    %782 = vmatprep.subr.mxu0 0.0
    %783 = vmatpush1.msra.mxu0 0.0
    %784 = vmatprep.subr.mxu0 0.0
    %785 = vmatpush1.msra.mxu0 0.0
    %786 = vmatprep.subr.mxu0 0.0
    %787 = vmatpush1.msra.mxu0 0.0
    %788 = vmatprep.subr.mxu0 0.0
    %789 = vmatpush1.msra.mxu0 0.0
    %790 = vmatprep.subr.mxu0 0.0
    %791 = vmatpush1.msra.mxu0 0.0
    %792 = vmatprep.subr.mxu0 0.0
    %793 = vmatpush1.msra.mxu0 0.0
    %794 = vmatprep.subr.mxu0 0.0
    %795 = vmatpush1.msra.mxu0 0.0
    %796 = vmatprep.subr.mxu0 0.0
    %797 = vmatpush1.msra.mxu0 0.0
    %798 = vmatprep.subr.mxu0 0.0
    %799 = vmatpush1.msra.mxu0 0.0
    %800 = vmatprep.subr.mxu0 0.0
    %801 = vmatpush1.msra.mxu0 0.0
    %802 = vmatprep.subr.mxu0 0.0
    %803 = vmatpush1.msra.mxu0 0.0
    %804 = vmatprep.subr.mxu0 0.0
    %805 = vmatpush1.msra.mxu0 0.0
    %806 = vmatprep.subr.mxu0 0.0
    %807 = vmatpush1.msra.mxu0 0.0
    %808 = vmatprep.subr.mxu0 0.0
    %809 = vmatpush1.msra.mxu0 0.0
    %810 = vmatprep.subr.mxu0 0.0
    %811 = vmatpush1.msra.mxu0 0.0
    %812 = vmatprep.subr.mxu0 0.0
    %813 = vmatpush1.msra.mxu0 0.0
    %814 = vmatprep.subr.mxu0 0.0
    %815 = vmatpush1.msra.mxu0 0.0
    %816 = vmatprep.subr.mxu0 0.0
    %817 = vmatpush1.msra.mxu0 0.0
    %818 = vmatprep.mubr.f32.mxu0 0.0
    %819 = vmatmul.mubr.f32.gmra.mrb[0].mxu0 %v752
    %v820 = vpop.f32.mrb[0].mxu0
    %v821 = vadd.f32 0.0, %v820
    %v822 = vpop.f32.mrb[0].mxu0
    %823 = vdwg.mxu0
    %824 = vrot.lane.b32.xlu0 %v411, 8
    %v825 = vpop.permute.xlu0 %824
    %827 = vrot.lane.b32.xlu0 %v579, 16
    %v828 = vpop.permute.xlu0 %827
    %830 = vrot.lane.b32.xlu0 %v747, 24
    %v831 = vpop.permute.xlu0 %830
    %v833 = vsel %vm155, %v243, %v825
    %vm834 = vcmask 130048
    %v835 = vsel %vm834, %v833, %v828
    %vm836 = vcmask 195584
    %v837 = vsel %vm836, %v835, %v831
    %839 = vrot.lane.b32.xlu0 %v485, 8
    %v840 = vpop.permute.xlu0 %839
    %843 = vrot.lane.b32.xlu0 %v653, 16
    %v844 = vpop.permute.xlu0 %843
    %847 = vrot.lane.b32.xlu0 %v821, 24
    %v848 = vpop.permute.xlu0 %847
    %v850 = vsel %vm155, %v317, %v840
    %v851 = vsel %vm834, %v850, %v844
    %v852 = vsel %vm836, %v851, %v848
    %s853 = scalar_lea.vmem [#allocation5], 8
    %v854 = vld [vmem:[%s853] sm:$0xff]
    %856 = vrot.lane.b32.xlu0 %v148, 96
    %v857 = vpop.permute.xlu0 %856
    %v858 = vsel %vm155, %v148, 0
    %v860 = vsel %vm155, %v857, 0
    %862 = vmatprep.subr.mxu0 0.0
    %863 = vmatpush1.xpose.msra.mxu0 %v860
    %864 = vmatprep.subr.mxu0 0.0
    %865 = vmatpush1.xpose.msra.mxu0 0.0
    %866 = vmatprep.subr.mxu0 0.0
    %867 = vmatpush1.xpose.msra.mxu0 0.0
    %868 = vmatprep.subr.mxu0 0.0
    %869 = vmatpush1.xpose.msra.mxu0 0.0
    %870 = vmatprep.subr.mxu0 0.0
    %871 = vmatpush1.xpose.msra.mxu0 0.0
    %872 = vmatprep.subr.mxu0 0.0
    %873 = vmatpush1.xpose.msra.mxu0 0.0
    %874 = vmatprep.subr.mxu0 0.0
    %875 = vmatpush1.xpose.msra.mxu0 0.0
    %876 = vmatprep.subr.mxu0 0.0
    %877 = vmatpush1.xpose.msra.mxu0 0.0
    %878 = vmatprep.subr.mxu0 0.0
    %879 = vmatpush1.xpose.msra.mxu0 0.0
    %880 = vmatprep.subr.mxu0 0.0
    %881 = vmatpush1.xpose.msra.mxu0 0.0
    %882 = vmatprep.subr.mxu0 0.0
    %883 = vmatpush1.xpose.msra.mxu0 0.0
    %884 = vmatprep.subr.mxu0 0.0
    %885 = vmatpush1.xpose.msra.mxu0 0.0
    %886 = vmatprep.subr.mxu0 0.0
    %887 = vmatpush1.xpose.msra.mxu0 0.0
    %888 = vmatprep.subr.mxu0 0.0
    %889 = vmatpush1.xpose.msra.mxu0 0.0
    %890 = vmatprep.subr.mxu0 0.0
    %891 = vmatpush1.xpose.msra.mxu0 0.0
    %892 = vmatprep.subr.mxu0 0.0
    %893 = vmatpush1.xpose.msra.mxu0 0.0
    %894 = vmatprep.subr.mxu0 0.0
    %895 = vmatpush1.xpose.msra.mxu0 0.0
    %896 = vmatprep.subr.mxu0 0.0
    %897 = vmatpush1.xpose.msra.mxu0 0.0
    %898 = vmatprep.subr.mxu0 0.0
    %899 = vmatpush1.xpose.msra.mxu0 0.0
    %900 = vmatprep.subr.mxu0 0.0
    %901 = vmatpush1.xpose.msra.mxu0 0.0
    %902 = vmatprep.subr.mxu0 0.0
    %903 = vmatpush1.xpose.msra.mxu0 0.0
    %904 = vmatprep.subr.mxu0 0.0
    %905 = vmatpush1.xpose.msra.mxu0 0.0
    %906 = vmatprep.subr.mxu0 0.0
    %907 = vmatpush1.xpose.msra.mxu0 0.0
    %908 = vmatprep.subr.mxu0 0.0
    %909 = vmatpush1.xpose.msra.mxu0 0.0
    %910 = vmatprep.subr.mxu0 0.0
    %911 = vmatpush1.xpose.msra.mxu0 0.0
    %912 = vmatprep.subr.mxu0 0.0
    %913 = vmatpush1.xpose.msra.mxu0 0.0
    %914 = vmatprep.subr.mxu0 0.0
    %915 = vmatpush1.xpose.msra.mxu0 0.0
    %916 = vmatprep.subr.mxu0 0.0
    %917 = vmatpush1.xpose.msra.mxu0 0.0
    %918 = vmatprep.subr.mxu0 0.0
    %919 = vmatpush1.xpose.msra.mxu0 0.0
    %920 = vmatprep.subr.mxu0 0.0
    %921 = vmatpush1.xpose.msra.mxu0 0.0
    %922 = vmatprep.subr.mxu0 0.0
    %923 = vmatpush1.xpose.msra.mxu0 0.0
    %924 = vmatprep.subr.mxu0 0.0
    %925 = vmatpush1.xpose.msra.mxu0 0.0
    %926 = vmatprep.mubr.f32.mxu0 0.0
    %927 = vmatmul.mubr.f32.gmra.mrb[0].mxu0 %v858
    %v928 = vpop.f32.mrb[0].mxu0
    %v929 = vadd.f32 %v854, %v928
    %v930 = vpop.f32.mrb[0].mxu0
    %931 = vdwg.mxu0
    %v932 = vsel %vm155, %v929, -inf
    %933 = vmax.xlane.f32.xlu0 %v932
    %v934 = vpop.xlane.xlu0 %933
    %v935 = vsub.f32 %v929, %v934
    %v936 = vmul.f32 %v935, 1.442695
    %v937 = vpow.pop %v936
    %v938 = vsel %vm155, %v937, 0.0
    %939 = vadd.xlane.f32.xlu0 %v938
    %v940 = vpop.xlane.xlu0 %939
    %v941 = vrcp.pop %v940
    %v942 = vmul.f32 %v940, %v941
    %v943 = vsub.f32 2.0, %v942
    %v944 = vmul.f32 %v941, %v943
    %v945 = vmul.f32 %v937, %v944
    %946 = vrot.lane.b32.xlu0 %v148, 64
    %v947 = vpop.permute.xlu0 %946
    %v950 = vsel %vm155, %v945, 0
    %952 = vmatprep.subr.mxu0 0.0
    %953 = vmatpush1.msra.mxu0 %v947
    %954 = vmatprep.subr.mxu0 0.0
    %955 = vmatpush1.msra.mxu0 0.0
    %956 = vmatprep.subr.mxu0 0.0
    %957 = vmatpush1.msra.mxu0 0.0
    %958 = vmatprep.subr.mxu0 0.0
    %959 = vmatpush1.msra.mxu0 0.0
    %960 = vmatprep.subr.mxu0 0.0
    %961 = vmatpush1.msra.mxu0 0.0
    %962 = vmatprep.subr.mxu0 0.0
    %963 = vmatpush1.msra.mxu0 0.0
    %964 = vmatprep.subr.mxu0 0.0
    %965 = vmatpush1.msra.mxu0 0.0
    %966 = vmatprep.subr.mxu0 0.0
    %967 = vmatpush1.msra.mxu0 0.0
    %968 = vmatprep.subr.mxu0 0.0
    %969 = vmatpush1.msra.mxu0 0.0
    %970 = vmatprep.subr.mxu0 0.0
    %971 = vmatpush1.msra.mxu0 0.0
    %972 = vmatprep.subr.mxu0 0.0
    %973 = vmatpush1.msra.mxu0 0.0
    %974 = vmatprep.subr.mxu0 0.0
    %975 = vmatpush1.msra.mxu0 0.0
    %976 = vmatprep.subr.mxu0 0.0
    %977 = vmatpush1.msra.mxu0 0.0
    %978 = vmatprep.subr.mxu0 0.0
    %979 = vmatpush1.msra.mxu0 0.0
    %980 = vmatprep.subr.mxu0 0.0
    %981 = vmatpush1.msra.mxu0 0.0
    %982 = vmatprep.subr.mxu0 0.0
    %983 = vmatpush1.msra.mxu0 0.0
    %984 = vmatprep.subr.mxu0 0.0
    %985 = vmatpush1.msra.mxu0 0.0
    %986 = vmatprep.subr.mxu0 0.0
    %987 = vmatpush1.msra.mxu0 0.0
    %988 = vmatprep.subr.mxu0 0.0
    %989 = vmatpush1.msra.mxu0 0.0
    %990 = vmatprep.subr.mxu0 0.0
    %991 = vmatpush1.msra.mxu0 0.0
    %992 = vmatprep.subr.mxu0 0.0
    %993 = vmatpush1.msra.mxu0 0.0
    %994 = vmatprep.subr.mxu0 0.0
    %995 = vmatpush1.msra.mxu0 0.0
    %996 = vmatprep.subr.mxu0 0.0
    %997 = vmatpush1.msra.mxu0 0.0
    %998 = vmatprep.subr.mxu0 0.0
    %999 = vmatpush1.msra.mxu0 0.0
    %1000 = vmatprep.subr.mxu0 0.0
    %1001 = vmatpush1.msra.mxu0 0.0
    %1002 = vmatprep.subr.mxu0 0.0
    %1003 = vmatpush1.msra.mxu0 0.0
    %1004 = vmatprep.subr.mxu0 0.0
    %1005 = vmatpush1.msra.mxu0 0.0
    %1006 = vmatprep.subr.mxu0 0.0
    %1007 = vmatpush1.msra.mxu0 0.0
    %1008 = vmatprep.subr.mxu0 0.0
    %1009 = vmatpush1.msra.mxu0 0.0
    %1010 = vmatprep.subr.mxu0 0.0
    %1011 = vmatpush1.msra.mxu0 0.0
    %1012 = vmatprep.subr.mxu0 0.0
    %1013 = vmatpush1.msra.mxu0 0.0
    %1014 = vmatprep.subr.mxu0 0.0
    %1015 = vmatpush1.msra.mxu0 0.0
    %1016 = vmatprep.mubr.f32.mxu0 0.0
    %1017 = vmatmul.mubr.f32.gmra.mrb[0].mxu0 %v950
    %v1018 = vpop.f32.mrb[0].mxu0
    %v1019 = vadd.f32 0.0, %v1018
    %v1020 = vpop.f32.mrb[0].mxu0
    %1021 = vdwg.mxu0
    %1022 = vrot.lane.b32.xlu0 %v148, 120
    %v1023 = vpop.permute.xlu0 %1022
    %1024 = vrot.lane.b32.xlu0 %v148, 88
    %v1025 = vpop.permute.xlu0 %1024
    %v1026 = vsel %vm155, %v1023, 0
    %v1028 = vsel %vm155, %v1025, 0
    %1030 = vmatprep.subr.mxu0 0.0
    %1031 = vmatpush1.xpose.msra.mxu0 %v1028
    %1032 = vmatprep.subr.mxu0 0.0
    %1033 = vmatpush1.xpose.msra.mxu0 0.0
    %1034 = vmatprep.subr.mxu0 0.0
    %1035 = vmatpush1.xpose.msra.mxu0 0.0
    %1036 = vmatprep.subr.mxu0 0.0
    %1037 = vmatpush1.xpose.msra.mxu0 0.0
    %1038 = vmatprep.subr.mxu0 0.0
    %1039 = vmatpush1.xpose.msra.mxu0 0.0
    %1040 = vmatprep.subr.mxu0 0.0
    %1041 = vmatpush1.xpose.msra.mxu0 0.0
    %1042 = vmatprep.subr.mxu0 0.0
    %1043 = vmatpush1.xpose.msra.mxu0 0.0
    %1044 = vmatprep.subr.mxu0 0.0
    %1045 = vmatpush1.xpose.msra.mxu0 0.0
    %1046 = vmatprep.subr.mxu0 0.0
    %1047 = vmatpush1.xpose.msra.mxu0 0.0
    %1048 = vmatprep.subr.mxu0 0.0
    %1049 = vmatpush1.xpose.msra.mxu0 0.0
    %1050 = vmatprep.subr.mxu0 0.0
    %1051 = vmatpush1.xpose.msra.mxu0 0.0
    %1052 = vmatprep.subr.mxu0 0.0
    %1053 = vmatpush1.xpose.msra.mxu0 0.0
    %1054 = vmatprep.subr.mxu0 0.0
    %1055 = vmatpush1.xpose.msra.mxu0 0.0
    %1056 = vmatprep.subr.mxu0 0.0
    %1057 = vmatpush1.xpose.msra.mxu0 0.0
    %1058 = vmatprep.subr.mxu0 0.0
    %1059 = vmatpush1.xpose.msra.mxu0 0.0
    %1060 = vmatprep.subr.mxu0 0.0
    %1061 = vmatpush1.xpose.msra.mxu0 0.0
    %1062 = vmatprep.subr.mxu0 0.0
    %1063 = vmatpush1.xpose.msra.mxu0 0.0
    %1064 = vmatprep.subr.mxu0 0.0
    %1065 = vmatpush1.xpose.msra.mxu0 0.0
    %1066 = vmatprep.subr.mxu0 0.0
    %1067 = vmatpush1.xpose.msra.mxu0 0.0
    %1068 = vmatprep.subr.mxu0 0.0
    %1069 = vmatpush1.xpose.msra.mxu0 0.0
    %1070 = vmatprep.subr.mxu0 0.0
    %1071 = vmatpush1.xpose.msra.mxu0 0.0
    %1072 = vmatprep.subr.mxu0 0.0
    %1073 = vmatpush1.xpose.msra.mxu0 0.0
    %1074 = vmatprep.subr.mxu0 0.0
    %1075 = vmatpush1.xpose.msra.mxu0 0.0
    %1076 = vmatprep.subr.mxu0 0.0
    %1077 = vmatpush1.xpose.msra.mxu0 0.0
    %1078 = vmatprep.subr.mxu0 0.0
    %1079 = vmatpush1.xpose.msra.mxu0 0.0
    %1080 = vmatprep.subr.mxu0 0.0
    %1081 = vmatpush1.xpose.msra.mxu0 0.0
    %1082 = vmatprep.subr.mxu0 0.0
    %1083 = vmatpush1.xpose.msra.mxu0 0.0
    %1084 = vmatprep.subr.mxu0 0.0
    %1085 = vmatpush1.xpose.msra.mxu0 0.0
    %1086 = vmatprep.subr.mxu0 0.0
    %1087 = vmatpush1.xpose.msra.mxu0 0.0
    %1088 = vmatprep.subr.mxu0 0.0
    %1089 = vmatpush1.xpose.msra.mxu0 0.0
    %1090 = vmatprep.subr.mxu0 0.0
    %1091 = vmatpush1.xpose.msra.mxu0 0.0
    %1092 = vmatprep.subr.mxu0 0.0
    %1093 = vmatpush1.xpose.msra.mxu0 0.0
    %1094 = vmatprep.mubr.f32.mxu0 0.0
    %1095 = vmatmul.mubr.f32.gmra.mrb[0].mxu0 %v1026
    %v1096 = vpop.f32.mrb[0].mxu0
    %v1097 = vadd.f32 %v854, %v1096
    %v1098 = vpop.f32.mrb[0].mxu0
    %1099 = vdwg.mxu0
    %v1100 = vsel %vm155, %v1097, -inf
    %1101 = vmax.xlane.f32.xlu0 %v1100
    %v1102 = vpop.xlane.xlu0 %1101
    %v1103 = vsub.f32 %v1097, %v1102
    %v1104 = vmul.f32 %v1103, 1.442695
    %v1105 = vpow.pop %v1104
    %v1106 = vsel %vm155, %v1105, 0.0
    %1107 = vadd.xlane.f32.xlu0 %v1106
    %v1108 = vpop.xlane.xlu0 %1107
    %v1109 = vrcp.pop %v1108
    %v1110 = vmul.f32 %v1108, %v1109
    %v1111 = vsub.f32 2.0, %v1110
    %v1112 = vmul.f32 %v1109, %v1111
    %v1113 = vmul.f32 %v1105, %v1112
    %1114 = vrot.lane.b32.xlu0 %v148, 56
    %v1115 = vpop.permute.xlu0 %1114
    %v1118 = vsel %vm155, %v1113, 0
    %1120 = vmatprep.subr.mxu0 0.0
    %1121 = vmatpush1.msra.mxu0 %v1115
    %1122 = vmatprep.subr.mxu0 0.0
    %1123 = vmatpush1.msra.mxu0 0.0
    %1124 = vmatprep.subr.mxu0 0.0
    %1125 = vmatpush1.msra.mxu0 0.0
    %1126 = vmatprep.subr.mxu0 0.0
    %1127 = vmatpush1.msra.mxu0 0.0
    %1128 = vmatprep.subr.mxu0 0.0
    %1129 = vmatpush1.msra.mxu0 0.0
    %1130 = vmatprep.subr.mxu0 0.0
    %1131 = vmatpush1.msra.mxu0 0.0
    %1132 = vmatprep.subr.mxu0 0.0
    %1133 = vmatpush1.msra.mxu0 0.0
    %1134 = vmatprep.subr.mxu0 0.0
    %1135 = vmatpush1.msra.mxu0 0.0
    %1136 = vmatprep.subr.mxu0 0.0
    %1137 = vmatpush1.msra.mxu0 0.0
    %1138 = vmatprep.subr.mxu0 0.0
    %1139 = vmatpush1.msra.mxu0 0.0
    %1140 = vmatprep.subr.mxu0 0.0
    %1141 = vmatpush1.msra.mxu0 0.0
    %1142 = vmatprep.subr.mxu0 0.0
    %1143 = vmatpush1.msra.mxu0 0.0
    %1144 = vmatprep.subr.mxu0 0.0
    %1145 = vmatpush1.msra.mxu0 0.0
    %1146 = vmatprep.subr.mxu0 0.0
    %1147 = vmatpush1.msra.mxu0 0.0
    %1148 = vmatprep.subr.mxu0 0.0
    %1149 = vmatpush1.msra.mxu0 0.0
    %1150 = vmatprep.subr.mxu0 0.0
    %1151 = vmatpush1.msra.mxu0 0.0
    %1152 = vmatprep.subr.mxu0 0.0
    %1153 = vmatpush1.msra.mxu0 0.0
    %1154 = vmatprep.subr.mxu0 0.0
    %1155 = vmatpush1.msra.mxu0 0.0
    %1156 = vmatprep.subr.mxu0 0.0
    %1157 = vmatpush1.msra.mxu0 0.0
    %1158 = vmatprep.subr.mxu0 0.0
    %1159 = vmatpush1.msra.mxu0 0.0
    %1160 = vmatprep.subr.mxu0 0.0
    %1161 = vmatpush1.msra.mxu0 0.0
    %1162 = vmatprep.subr.mxu0 0.0
    %1163 = vmatpush1.msra.mxu0 0.0
    %1164 = vmatprep.subr.mxu0 0.0
    %1165 = vmatpush1.msra.mxu0 0.0
    %1166 = vmatprep.subr.mxu0 0.0
    %1167 = vmatpush1.msra.mxu0 0.0
    %1168 = vmatprep.subr.mxu0 0.0
    %1169 = vmatpush1.msra.mxu0 0.0
    %1170 = vmatprep.subr.mxu0 0.0
    %1171 = vmatpush1.msra.mxu0 0.0
    %1172 = vmatprep.subr.mxu0 0.0
    %1173 = vmatpush1.msra.mxu0 0.0
    %1174 = vmatprep.subr.mxu0 0.0
    %1175 = vmatpush1.msra.mxu0 0.0
    %1176 = vmatprep.subr.mxu0 0.0
    %1177 = vmatpush1.msra.mxu0 0.0
    %1178 = vmatprep.subr.mxu0 0.0
    %1179 = vmatpush1.msra.mxu0 0.0
    %1180 = vmatprep.subr.mxu0 0.0
    %1181 = vmatpush1.msra.mxu0 0.0
    %1182 = vmatprep.subr.mxu0 0.0
    %1183 = vmatpush1.msra.mxu0 0.0
    %1184 = vmatprep.mubr.f32.mxu0 0.0
    %1185 = vmatmul.mubr.f32.gmra.mrb[0].mxu0 %v1118
    %v1186 = vpop.f32.mrb[0].mxu0
    %v1187 = vadd.f32 0.0, %v1186
    %v1188 = vpop.f32.mrb[0].mxu0
    %1189 = vdwg.mxu0
    %1190 = vrot.lane.b32.xlu0 %v148, 112
    %v1191 = vpop.permute.xlu0 %1190
    %1192 = vrot.lane.b32.xlu0 %v148, 80
    %v1193 = vpop.permute.xlu0 %1192
    %v1194 = vsel %vm155, %v1191, 0
    %v1196 = vsel %vm155, %v1193, 0
    %1198 = vmatprep.subr.mxu0 0.0
    %1199 = vmatpush1.xpose.msra.mxu0 %v1196
    %1200 = vmatprep.subr.mxu0 0.0
    %1201 = vmatpush1.xpose.msra.mxu0 0.0
    %1202 = vmatprep.subr.mxu0 0.0
    %1203 = vmatpush1.xpose.msra.mxu0 0.0
    %1204 = vmatprep.subr.mxu0 0.0
    %1205 = vmatpush1.xpose.msra.mxu0 0.0
    %1206 = vmatprep.subr.mxu0 0.0
    %1207 = vmatpush1.xpose.msra.mxu0 0.0
    %1208 = vmatprep.subr.mxu0 0.0
    %1209 = vmatpush1.xpose.msra.mxu0 0.0
    %1210 = vmatprep.subr.mxu0 0.0
    %1211 = vmatpush1.xpose.msra.mxu0 0.0
    %1212 = vmatprep.subr.mxu0 0.0
    %1213 = vmatpush1.xpose.msra.mxu0 0.0
    %1214 = vmatprep.subr.mxu0 0.0
    %1215 = vmatpush1.xpose.msra.mxu0 0.0
    %1216 = vmatprep.subr.mxu0 0.0
    %1217 = vmatpush1.xpose.msra.mxu0 0.0
    %1218 = vmatprep.subr.mxu0 0.0
    %1219 = vmatpush1.xpose.msra.mxu0 0.0
    %1220 = vmatprep.subr.mxu0 0.0
    %1221 = vmatpush1.xpose.msra.mxu0 0.0
    %1222 = vmatprep.subr.mxu0 0.0
    %1223 = vmatpush1.xpose.msra.mxu0 0.0
    %1224 = vmatprep.subr.mxu0 0.0
    %1225 = vmatpush1.xpose.msra.mxu0 0.0
    %1226 = vmatprep.subr.mxu0 0.0
    %1227 = vmatpush1.xpose.msra.mxu0 0.0
    %1228 = vmatprep.subr.mxu0 0.0
    %1229 = vmatpush1.xpose.msra.mxu0 0.0
    %1230 = vmatprep.subr.mxu0 0.0
    %1231 = vmatpush1.xpose.msra.mxu0 0.0
    %1232 = vmatprep.subr.mxu0 0.0
    %1233 = vmatpush1.xpose.msra.mxu0 0.0
    %1234 = vmatprep.subr.mxu0 0.0
    %1235 = vmatpush1.xpose.msra.mxu0 0.0
    %1236 = vmatprep.subr.mxu0 0.0
    %1237 = vmatpush1.xpose.msra.mxu0 0.0
    %1238 = vmatprep.subr.mxu0 0.0
    %1239 = vmatpush1.xpose.msra.mxu0 0.0
    %1240 = vmatprep.subr.mxu0 0.0
    %1241 = vmatpush1.xpose.msra.mxu0 0.0
    %1242 = vmatprep.subr.mxu0 0.0
    %1243 = vmatpush1.xpose.msra.mxu0 0.0
    %1244 = vmatprep.subr.mxu0 0.0
    %1245 = vmatpush1.xpose.msra.mxu0 0.0
    %1246 = vmatprep.subr.mxu0 0.0
    %1247 = vmatpush1.xpose.msra.mxu0 0.0
    %1248 = vmatprep.subr.mxu0 0.0
    %1249 = vmatpush1.xpose.msra.mxu0 0.0
    %1250 = vmatprep.subr.mxu0 0.0
    %1251 = vmatpush1.xpose.msra.mxu0 0.0
    %1252 = vmatprep.subr.mxu0 0.0
    %1253 = vmatpush1.xpose.msra.mxu0 0.0
    %1254 = vmatprep.subr.mxu0 0.0
    %1255 = vmatpush1.xpose.msra.mxu0 0.0
    %1256 = vmatprep.subr.mxu0 0.0
    %1257 = vmatpush1.xpose.msra.mxu0 0.0
    %1258 = vmatprep.subr.mxu0 0.0
    %1259 = vmatpush1.xpose.msra.mxu0 0.0
    %1260 = vmatprep.subr.mxu0 0.0
    %1261 = vmatpush1.xpose.msra.mxu0 0.0
    %1262 = vmatprep.mubr.f32.mxu0 0.0
    %1263 = vmatmul.mubr.f32.gmra.mrb[0].mxu0 %v1194
    %v1264 = vpop.f32.mrb[0].mxu0
    %v1265 = vadd.f32 %v854, %v1264
    %v1266 = vpop.f32.mrb[0].mxu0
    %1267 = vdwg.mxu0
    %v1268 = vsel %vm155, %v1265, -inf
    %1269 = vmax.xlane.f32.xlu0 %v1268
    %v1270 = vpop.xlane.xlu0 %1269
    %v1271 = vsub.f32 %v1265, %v1270
    %v1272 = vmul.f32 %v1271, 1.442695
    %v1273 = vpow.pop %v1272
    %v1274 = vsel %vm155, %v1273, 0.0
    %1275 = vadd.xlane.f32.xlu0 %v1274
    %v1276 = vpop.xlane.xlu0 %1275
    %v1277 = vrcp.pop %v1276
    %v1278 = vmul.f32 %v1276, %v1277
    %v1279 = vsub.f32 2.0, %v1278
    %v1280 = vmul.f32 %v1277, %v1279
    %v1281 = vmul.f32 %v1273, %v1280
    %1282 = vrot.lane.b32.xlu0 %v148, 48
    %v1283 = vpop.permute.xlu0 %1282
    %v1286 = vsel %vm155, %v1281, 0
    %1288 = vmatprep.subr.mxu0 0.0
    %1289 = vmatpush1.msra.mxu0 %v1283
    %1290 = vmatprep.subr.mxu0 0.0
    %1291 = vmatpush1.msra.mxu0 0.0
    %1292 = vmatprep.subr.mxu0 0.0
    %1293 = vmatpush1.msra.mxu0 0.0
    %1294 = vmatprep.subr.mxu0 0.0
    %1295 = vmatpush1.msra.mxu0 0.0
    %1296 = vmatprep.subr.mxu0 0.0
    %1297 = vmatpush1.msra.mxu0 0.0
    %1298 = vmatprep.subr.mxu0 0.0
    %1299 = vmatpush1.msra.mxu0 0.0
    %1300 = vmatprep.subr.mxu0 0.0
    %1301 = vmatpush1.msra.mxu0 0.0
    %1302 = vmatprep.subr.mxu0 0.0
    %1303 = vmatpush1.msra.mxu0 0.0
    %1304 = vmatprep.subr.mxu0 0.0
    %1305 = vmatpush1.msra.mxu0 0.0
    %1306 = vmatprep.subr.mxu0 0.0
    %1307 = vmatpush1.msra.mxu0 0.0
    %1308 = vmatprep.subr.mxu0 0.0
    %1309 = vmatpush1.msra.mxu0 0.0
    %1310 = vmatprep.subr.mxu0 0.0
    %1311 = vmatpush1.msra.mxu0 0.0
    %1312 = vmatprep.subr.mxu0 0.0
    %1313 = vmatpush1.msra.mxu0 0.0
    %1314 = vmatprep.subr.mxu0 0.0
    %1315 = vmatpush1.msra.mxu0 0.0
    %1316 = vmatprep.subr.mxu0 0.0
    %1317 = vmatpush1.msra.mxu0 0.0
    %1318 = vmatprep.subr.mxu0 0.0
    %1319 = vmatpush1.msra.mxu0 0.0
    %1320 = vmatprep.subr.mxu0 0.0
    %1321 = vmatpush1.msra.mxu0 0.0
    %1322 = vmatprep.subr.mxu0 0.0
    %1323 = vmatpush1.msra.mxu0 0.0
    %1324 = vmatprep.subr.mxu0 0.0
    %1325 = vmatpush1.msra.mxu0 0.0
    %1326 = vmatprep.subr.mxu0 0.0
    %1327 = vmatpush1.msra.mxu0 0.0
    %1328 = vmatprep.subr.mxu0 0.0
    %1329 = vmatpush1.msra.mxu0 0.0
    %1330 = vmatprep.subr.mxu0 0.0
    %1331 = vmatpush1.msra.mxu0 0.0
    %1332 = vmatprep.subr.mxu0 0.0
    %1333 = vmatpush1.msra.mxu0 0.0
    %1334 = vmatprep.subr.mxu0 0.0
    %1335 = vmatpush1.msra.mxu0 0.0
    %1336 = vmatprep.subr.mxu0 0.0
    %1337 = vmatpush1.msra.mxu0 0.0
    %1338 = vmatprep.subr.mxu0 0.0
    %1339 = vmatpush1.msra.mxu0 0.0
    %1340 = vmatprep.subr.mxu0 0.0
    %1341 = vmatpush1.msra.mxu0 0.0
    %1342 = vmatprep.subr.mxu0 0.0
    %1343 = vmatpush1.msra.mxu0 0.0
    %1344 = vmatprep.subr.mxu0 0.0
    %1345 = vmatpush1.msra.mxu0 0.0
    %1346 = vmatprep.subr.mxu0 0.0
    %1347 = vmatpush1.msra.mxu0 0.0
    %1348 = vmatprep.subr.mxu0 0.0
    %1349 = vmatpush1.msra.mxu0 0.0
    %1350 = vmatprep.subr.mxu0 0.0
    %1351 = vmatpush1.msra.mxu0 0.0
    %1352 = vmatprep.mubr.f32.mxu0 0.0
    %1353 = vmatmul.mubr.f32.gmra.mrb[0].mxu0 %v1286
    %v1354 = vpop.f32.mrb[0].mxu0
    %v1355 = vadd.f32 0.0, %v1354
    %v1356 = vpop.f32.mrb[0].mxu0
    %1357 = vdwg.mxu0
    %1358 = vrot.lane.b32.xlu0 %v148, 104
    %v1359 = vpop.permute.xlu0 %1358
    %1360 = vrot.lane.b32.xlu0 %v148, 72
    %v1361 = vpop.permute.xlu0 %1360
    %v1362 = vsel %vm155, %v1359, 0
    %v1364 = vsel %vm155, %v1361, 0
    %1366 = vmatprep.subr.mxu0 0.0
    %1367 = vmatpush1.xpose.msra.mxu0 %v1364
    %1368 = vmatprep.subr.mxu0 0.0
    %1369 = vmatpush1.xpose.msra.mxu0 0.0
    %1370 = vmatprep.subr.mxu0 0.0
    %1371 = vmatpush1.xpose.msra.mxu0 0.0
    %1372 = vmatprep.subr.mxu0 0.0
    %1373 = vmatpush1.xpose.msra.mxu0 0.0
    %1374 = vmatprep.subr.mxu0 0.0
    %1375 = vmatpush1.xpose.msra.mxu0 0.0
    %1376 = vmatprep.subr.mxu0 0.0
    %1377 = vmatpush1.xpose.msra.mxu0 0.0
    %1378 = vmatprep.subr.mxu0 0.0
    %1379 = vmatpush1.xpose.msra.mxu0 0.0
    %1380 = vmatprep.subr.mxu0 0.0
    %1381 = vmatpush1.xpose.msra.mxu0 0.0
    %1382 = vmatprep.subr.mxu0 0.0
    %1383 = vmatpush1.xpose.msra.mxu0 0.0
    %1384 = vmatprep.subr.mxu0 0.0
    %1385 = vmatpush1.xpose.msra.mxu0 0.0
    %1386 = vmatprep.subr.mxu0 0.0
    %1387 = vmatpush1.xpose.msra.mxu0 0.0
    %1388 = vmatprep.subr.mxu0 0.0
    %1389 = vmatpush1.xpose.msra.mxu0 0.0
    %1390 = vmatprep.subr.mxu0 0.0
    %1391 = vmatpush1.xpose.msra.mxu0 0.0
    %1392 = vmatprep.subr.mxu0 0.0
    %1393 = vmatpush1.xpose.msra.mxu0 0.0
    %1394 = vmatprep.subr.mxu0 0.0
    %1395 = vmatpush1.xpose.msra.mxu0 0.0
    %1396 = vmatprep.subr.mxu0 0.0
    %1397 = vmatpush1.xpose.msra.mxu0 0.0
    %1398 = vmatprep.subr.mxu0 0.0
    %1399 = vmatpush1.xpose.msra.mxu0 0.0
    %1400 = vmatprep.subr.mxu0 0.0
    %1401 = vmatpush1.xpose.msra.mxu0 0.0
    %1402 = vmatprep.subr.mxu0 0.0
    %1403 = vmatpush1.xpose.msra.mxu0 0.0
    %1404 = vmatprep.subr.mxu0 0.0
    %1405 = vmatpush1.xpose.msra.mxu0 0.0
    %1406 = vmatprep.subr.mxu0 0.0
    %1407 = vmatpush1.xpose.msra.mxu0 0.0
    %1408 = vmatprep.subr.mxu0 0.0
    %1409 = vmatpush1.xpose.msra.mxu0 0.0
    %1410 = vmatprep.subr.mxu0 0.0
    %1411 = vmatpush1.xpose.msra.mxu0 0.0
    %1412 = vmatprep.subr.mxu0 0.0
    %1413 = vmatpush1.xpose.msra.mxu0 0.0
    %1414 = vmatprep.subr.mxu0 0.0
    %1415 = vmatpush1.xpose.msra.mxu0 0.0
    %1416 = vmatprep.subr.mxu0 0.0
    %1417 = vmatpush1.xpose.msra.mxu0 0.0
    %1418 = vmatprep.subr.mxu0 0.0
    %1419 = vmatpush1.xpose.msra.mxu0 0.0
    %1420 = vmatprep.subr.mxu0 0.0
    %1421 = vmatpush1.xpose.msra.mxu0 0.0
    %1422 = vmatprep.subr.mxu0 0.0
    %1423 = vmatpush1.xpose.msra.mxu0 0.0
    %1424 = vmatprep.subr.mxu0 0.0
    %1425 = vmatpush1.xpose.msra.mxu0 0.0
    %1426 = vmatprep.subr.mxu0 0.0
    %1427 = vmatpush1.xpose.msra.mxu0 0.0
    %1428 = vmatprep.subr.mxu0 0.0
    %1429 = vmatpush1.xpose.msra.mxu0 0.0
    %1430 = vmatprep.mubr.f32.mxu0 0.0
    %1431 = vmatmul.mubr.f32.gmra.mrb[0].mxu0 %v1362
    %v1432 = vpop.f32.mrb[0].mxu0
    %v1433 = vadd.f32 %v854, %v1432
    %v1434 = vpop.f32.mrb[0].mxu0
    %1435 = vdwg.mxu0
    %v1436 = vsel %vm155, %v1433, -inf
    %1437 = vmax.xlane.f32.xlu0 %v1436
    %v1438 = vpop.xlane.xlu0 %1437
    %v1439 = vsub.f32 %v1433, %v1438
    %v1440 = vmul.f32 %v1439, 1.442695
    %v1441 = vpow.pop %v1440
    %v1442 = vsel %vm155, %v1441, 0.0
    %1443 = vadd.xlane.f32.xlu0 %v1442
    %v1444 = vpop.xlane.xlu0 %1443
    %v1445 = vrcp.pop %v1444
    %v1446 = vmul.f32 %v1444, %v1445
    %v1447 = vsub.f32 2.0, %v1446
    %v1448 = vmul.f32 %v1445, %v1447
    %v1449 = vmul.f32 %v1441, %v1448
    %1450 = vrot.lane.b32.xlu0 %v148, 40
    %v1451 = vpop.permute.xlu0 %1450
    %v1454 = vsel %vm155, %v1449, 0
    %1456 = vmatprep.subr.mxu0 0.0
    %1457 = vmatpush1.msra.mxu0 %v1451
    %1458 = vmatprep.subr.mxu0 0.0
    %1459 = vmatpush1.msra.mxu0 0.0
    %1460 = vmatprep.subr.mxu0 0.0
    %1461 = vmatpush1.msra.mxu0 0.0
    %1462 = vmatprep.subr.mxu0 0.0
    %1463 = vmatpush1.msra.mxu0 0.0
    %1464 = vmatprep.subr.mxu0 0.0
    %1465 = vmatpush1.msra.mxu0 0.0
    %1466 = vmatprep.subr.mxu0 0.0
    %1467 = vmatpush1.msra.mxu0 0.0
    %1468 = vmatprep.subr.mxu0 0.0
    %1469 = vmatpush1.msra.mxu0 0.0
    %1470 = vmatprep.subr.mxu0 0.0
    %1471 = vmatpush1.msra.mxu0 0.0
    %1472 = vmatprep.subr.mxu0 0.0
    %1473 = vmatpush1.msra.mxu0 0.0
    %1474 = vmatprep.subr.mxu0 0.0
    %1475 = vmatpush1.msra.mxu0 0.0
    %1476 = vmatprep.subr.mxu0 0.0
    %1477 = vmatpush1.msra.mxu0 0.0
    %1478 = vmatprep.subr.mxu0 0.0
    %1479 = vmatpush1.msra.mxu0 0.0
    %1480 = vmatprep.subr.mxu0 0.0
    %1481 = vmatpush1.msra.mxu0 0.0
    %1482 = vmatprep.subr.mxu0 0.0
    %1483 = vmatpush1.msra.mxu0 0.0
    %1484 = vmatprep.subr.mxu0 0.0
    %1485 = vmatpush1.msra.mxu0 0.0
    %1486 = vmatprep.subr.mxu0 0.0
    %1487 = vmatpush1.msra.mxu0 0.0
    %1488 = vmatprep.subr.mxu0 0.0
    %1489 = vmatpush1.msra.mxu0 0.0
    %1490 = vmatprep.subr.mxu0 0.0
    %1491 = vmatpush1.msra.mxu0 0.0
    %1492 = vmatprep.subr.mxu0 0.0
    %1493 = vmatpush1.msra.mxu0 0.0
    %1494 = vmatprep.subr.mxu0 0.0
    %1495 = vmatpush1.msra.mxu0 0.0
    %1496 = vmatprep.subr.mxu0 0.0
    %1497 = vmatpush1.msra.mxu0 0.0
    %1498 = vmatprep.subr.mxu0 0.0
    %1499 = vmatpush1.msra.mxu0 0.0
    %1500 = vmatprep.subr.mxu0 0.0
    %1501 = vmatpush1.msra.mxu0 0.0
    %1502 = vmatprep.subr.mxu0 0.0
    %1503 = vmatpush1.msra.mxu0 0.0
    %1504 = vmatprep.subr.mxu0 0.0
    %1505 = vmatpush1.msra.mxu0 0.0
    %1506 = vmatprep.subr.mxu0 0.0
    %1507 = vmatpush1.msra.mxu0 0.0
    %1508 = vmatprep.subr.mxu0 0.0
    %1509 = vmatpush1.msra.mxu0 0.0
    %1510 = vmatprep.subr.mxu0 0.0
    %1511 = vmatpush1.msra.mxu0 0.0
    %1512 = vmatprep.subr.mxu0 0.0
    %1513 = vmatpush1.msra.mxu0 0.0
    %1514 = vmatprep.subr.mxu0 0.0
    %1515 = vmatpush1.msra.mxu0 0.0
    %1516 = vmatprep.subr.mxu0 0.0
    %1517 = vmatpush1.msra.mxu0 0.0
    %1518 = vmatprep.subr.mxu0 0.0
    %1519 = vmatpush1.msra.mxu0 0.0
    %1520 = vmatprep.mubr.f32.mxu0 0.0
    %1521 = vmatmul.mubr.f32.gmra.mrb[0].mxu0 %v1454
    %v1522 = vpop.f32.mrb[0].mxu0
    %v1523 = vadd.f32 0.0, %v1522
    %v1524 = vpop.f32.mrb[0].mxu0
    %1525 = vdwg.mxu0
    %1526 = vrot.lane.b32.xlu0 %v1113, 8
    %v1527 = vpop.permute.xlu0 %1526
    %1529 = vrot.lane.b32.xlu0 %v1281, 16
    %v1530 = vpop.permute.xlu0 %1529
    %1532 = vrot.lane.b32.xlu0 %v1449, 24
    %v1533 = vpop.permute.xlu0 %1532
    %v1535 = vsel %vm155, %v945, %v1527
    %v1536 = vsel %vm834, %v1535, %v1530
    %v1537 = vsel %vm836, %v1536, %v1533
    %1539 = vrot.lane.b32.xlu0 %v1187, 8
    %v1540 = vpop.permute.xlu0 %1539
    %1543 = vrot.lane.b32.xlu0 %v1355, 16
    %v1544 = vpop.permute.xlu0 %1543
    %1547 = vrot.lane.b32.xlu0 %v1523, 24
    %v1548 = vpop.permute.xlu0 %1547
    %v1550 = vsel %vm155, %v1019, %v1540
    %v1551 = vsel %vm834, %v1550, %v1544
    %v1552 = vsel %vm836, %v1551, %v1548
    %1553 = vst.msk [vmem:[#allocation8] sm:$0xff] %vm69, %v837
    %1554 = vst.msk [vmem:[#allocation8 + $0x8] sm:$0xff] %vm69, %v1537
    %v1555 = vld [vmem:[%s3] sm:$0xff]
    %v1556 = vld [vmem:[%s3 + $0x8] sm:$0xff]
    %v1557 = vld [vmem:[%s3 + $0x10] sm:$0xff]
    %v1558 = vld [vmem:[%s3 + $0x18] sm:$0xff]
    %v1559 = vlaneseq
    %v1560 = vshrl.u32 %v1559, 7
    %v1561 = vsub.s32 1, %v1560
    %v1562 = vrot.slane %v60, %v1561
    %v1564 = vsel %vm69, %v852, 0
    %v1567 = vsel %vm69, %v1552, 0
    %1569 = vmatprep.subr.mxu0 0.0
    %1570 = vmatpush1.msra.mxu0 %v1555
    %1571 = vmatprep.subr.mxu0 0.0
    %1572 = vmatpush1.msra.mxu0 %v1556
    %1573 = vmatprep.subr.mxu0 0.0
    %1574 = vmatpush1.msra.mxu0 %v1557
    %1575 = vmatprep.subr.mxu0 0.0
    %1576 = vmatpush1.msra.mxu0 %v1558
    %1577 = vmatprep.subr.mxu0 0.0
    %1578 = vmatpush1.msra.mxu0 0.0
    %1579 = vmatprep.subr.mxu0 0.0
    %1580 = vmatpush1.msra.mxu0 0.0
    %1581 = vmatprep.subr.mxu0 0.0
    %1582 = vmatpush1.msra.mxu0 0.0
    %1583 = vmatprep.subr.mxu0 0.0
    %1584 = vmatpush1.msra.mxu0 0.0
    %1585 = vmatprep.subr.mxu0 0.0
    %1586 = vmatpush1.msra.mxu0 0.0
    %1587 = vmatprep.subr.mxu0 0.0
    %1588 = vmatpush1.msra.mxu0 0.0
    %1589 = vmatprep.subr.mxu0 0.0
    %1590 = vmatpush1.msra.mxu0 0.0
    %1591 = vmatprep.subr.mxu0 0.0
    %1592 = vmatpush1.msra.mxu0 0.0
    %1593 = vmatprep.subr.mxu0 0.0
    %1594 = vmatpush1.msra.mxu0 0.0
    %1595 = vmatprep.subr.mxu0 0.0
    %1596 = vmatpush1.msra.mxu0 0.0
    %1597 = vmatprep.subr.mxu0 0.0
    %1598 = vmatpush1.msra.mxu0 0.0
    %1599 = vmatprep.subr.mxu0 0.0
    %1600 = vmatpush1.msra.mxu0 0.0
    %1601 = vmatprep.subr.mxu0 0.0
    %1602 = vmatpush1.msra.mxu0 0.0
    %1603 = vmatprep.subr.mxu0 0.0
    %1604 = vmatpush1.msra.mxu0 0.0
    %1605 = vmatprep.subr.mxu0 0.0
    %1606 = vmatpush1.msra.mxu0 0.0
    %1607 = vmatprep.subr.mxu0 0.0
    %1608 = vmatpush1.msra.mxu0 0.0
    %1609 = vmatprep.subr.mxu0 0.0
    %1610 = vmatpush1.msra.mxu0 0.0
    %1611 = vmatprep.subr.mxu0 0.0
    %1612 = vmatpush1.msra.mxu0 0.0
    %1613 = vmatprep.subr.mxu0 0.0
    %1614 = vmatpush1.msra.mxu0 0.0
    %1615 = vmatprep.subr.mxu0 0.0
    %1616 = vmatpush1.msra.mxu0 0.0
    %1617 = vmatprep.subr.mxu0 0.0
    %1618 = vmatpush1.msra.mxu0 0.0
    %1619 = vmatprep.subr.mxu0 0.0
    %1620 = vmatpush1.msra.mxu0 0.0
    %1621 = vmatprep.subr.mxu0 0.0
    %1622 = vmatpush1.msra.mxu0 0.0
    %1623 = vmatprep.subr.mxu0 0.0
    %1624 = vmatpush1.msra.mxu0 0.0
    %1625 = vmatprep.subr.mxu0 0.0
    %1626 = vmatpush1.msra.mxu0 0.0
    %1627 = vmatprep.subr.mxu0 0.0
    %1628 = vmatpush1.msra.mxu0 0.0
    %1629 = vmatprep.subr.mxu0 0.0
    %1630 = vmatpush1.msra.mxu0 0.0
    %1631 = vmatprep.subr.mxu0 0.0
    %1632 = vmatpush1.msra.mxu0 0.0
    %1633 = vmatprep.mubr.f32.mxu0 0.0
    %1634 = vmatmul.mubr.f32.gmra.mrb[0].mxu0 %v1564
    %v1635 = vpop.f32.mrb[0].mxu0
    %v1636 = vadd.f32 %v1562, %v1635
    %v1637 = vpop.f32.mrb[0].mxu0
    %1638 = vmatprep.mubr.f32.mxu0 0.0
    %1639 = vmatmul.mubr.f32.gmra.mrb[0].mxu0 %v1567
    %v1640 = vpop.f32.mrb[0].mxu0
    %v1641 = vadd.f32 %v1562, %v1640
    %v1642 = vpop.f32.mrb[0].mxu0
    %1643 = vdwg.mxu0
    %v1644 = vadd.f32 %v1636, %v58
    %v1645 = vadd.f32 %v1641, %v59
    %v1646 = vsel %vm69, %v1644, 0.0
    %1647 = vadd.xlane.f32.xlu0 %v1646
    %v1648 = vpop.xlane.xlu0 %1647
    %v1649 = vsel %vm69, %v1645, 0.0
    %1650 = vadd.xlane.f32.xlu0 %v1649
    %v1651 = vpop.xlane.xlu0 %1650
    %v1652 = vrcp.pop 32.0
    %v1653 = vmul.f32 %v1648, %v1652
    %v1654 = vmul.f32 %v1651, %v1652
    %v1655 = vsub.f32 %v1644, %v1653
    %v1656 = vsub.f32 %v1645, %v1654
    %v1657 = vmul.f32 %v1655, %v1655
    %v1658 = vmul.f32 %v1656, %v1656
    %v1659 = vsel %vm69, %v1657, 0.0
    %1660 = vadd.xlane.f32.xlu0 %v1659
    %v1661 = vpop.xlane.xlu0 %1660
    %v1662 = vsel %vm69, %v1658, 0.0
    %1663 = vadd.xlane.f32.xlu0 %v1662
    %v1664 = vpop.xlane.xlu0 %1663
    %v1665 = vmul.f32 %v1661, %v1652
    %v1666 = vmul.f32 %v1664, %v1652
    %v1667 = vadd.f32 %v1665, 1e-06
    %v1668 = vadd.f32 %v1666, 1e-06
    %v1669 = vrsqrt.pop %v1667
    %v1670 = vrsqrt.pop %v1668
    %v1671 = vmul.f32 %v1655, %v1669
    %v1672 = vmul.f32 %v1656, %v1670
    %v1673 = vlaneseq
    %v1674 = vshrl.u32 %v1673, 7
    %v1675 = vsub.s32 2, %v1674
    %v1676 = vrot.slane %v60, %v1675
    %v1677 = vmul.f32 %v1671, %v1676
    %v1678 = vmul.f32 %v1672, %v1676
    %v1679 = vlaneseq
    %v1680 = vshrl.u32 %v1679, 7
    %v1681 = vsub.s32 3, %v1680
    %v1682 = vrot.slane %v60, %v1681
    %v1683 = vadd.f32 %v1677, %v1682
    %v1684 = vadd.f32 %v1678, %v1682
    %v1685 = vsel %vm69, %v1683, 0.0
    %1686 = vadd.xlane.f32.xlu0 %v1685
    %v1687 = vpop.xlane.xlu0 %1686
    %v1688 = vsel %vm69, %v1684, 0.0
    %1689 = vadd.xlane.f32.xlu0 %v1688
    %v1690 = vpop.xlane.xlu0 %1689
    %v1691 = vmul.f32 %v1687, %v1652
    %v1692 = vmul.f32 %v1690, %v1652
    %v1693 = vsub.f32 %v1683, %v1691
    %v1694 = vsub.f32 %v1684, %v1692
    %v1695 = vmul.f32 %v1693, %v1693
    %v1696 = vmul.f32 %v1694, %v1694
    %v1697 = vsel %vm69, %v1695, 0.0
    %1698 = vadd.xlane.f32.xlu0 %v1697
    %v1699 = vpop.xlane.xlu0 %1698
    %v1700 = vsel %vm69, %v1696, 0.0
    %1701 = vadd.xlane.f32.xlu0 %v1700
    %v1702 = vpop.xlane.xlu0 %1701
    %v1703 = vmul.f32 %v1699, %v1652
    %v1704 = vmul.f32 %v1702, %v1652
    %v1705 = vadd.f32 %v1703, 1e-06
    %v1706 = vadd.f32 %v1704, 1e-06
    %v1707 = vrsqrt.pop %v1705
    %v1708 = vrsqrt.pop %v1706
    %v1709 = vmul.f32 %v1693, %v1707
    %v1710 = vmul.f32 %v1694, %v1708
    %v1711 = vlaneseq
    %v1712 = vshrl.u32 %v1711, 7
    %v1713 = vsub.s32 4, %v1712
    %v1714 = vrot.slane %v60, %v1713
    %v1715 = vmul.f32 %v1709, %v1714
    %v1716 = vmul.f32 %v1710, %v1714
    %v1717 = vlaneseq
    %v1718 = vshrl.u32 %v1717, 7
    %v1719 = vsub.s32 5, %v1718
    %v1720 = vrot.slane %v60, %v1719
    %v1721 = vadd.f32 %v1715, %v1720
    %v1722 = vadd.f32 %v1716, %v1720
    %v1723 = vld [vmem:[%s4] sm:$0xff]
    %v1724 = vld [vmem:[%s4 + $0x8] sm:$0xff]
    %v1725 = vld [vmem:[%s4 + $0x10] sm:$0xff]
    %v1726 = vld [vmem:[%s4 + $0x18] sm:$0xff]
    %v1727 = vlaneseq
    %v1728 = vshrl.u32 %v1727, 7
    %v1729 = vsub.s32 6, %v1728
    %v1730 = vrot.slane %v60, %v1729
    %v1732 = vsel %vm69, %v1721, 0
    %v1735 = vsel %vm69, %v1722, 0
    %1737 = vmatprep.subr.mxu0 0.0
    %1738 = vmatpush1.msra.mxu0 %v1723
    %1739 = vmatprep.subr.mxu0 0.0
    %1740 = vmatpush1.msra.mxu0 %v1724
    %1741 = vmatprep.subr.mxu0 0.0
    %1742 = vmatpush1.msra.mxu0 %v1725
    %1743 = vmatprep.subr.mxu0 0.0
    %1744 = vmatpush1.msra.mxu0 %v1726
    %1745 = vmatprep.subr.mxu0 0.0
    %1746 = vmatpush1.msra.mxu0 0.0
    %1747 = vmatprep.subr.mxu0 0.0
    %1748 = vmatpush1.msra.mxu0 0.0
    %1749 = vmatprep.subr.mxu0 0.0
    %1750 = vmatpush1.msra.mxu0 0.0
    %1751 = vmatprep.subr.mxu0 0.0
    %1752 = vmatpush1.msra.mxu0 0.0
    %1753 = vmatprep.subr.mxu0 0.0
    %1754 = vmatpush1.msra.mxu0 0.0
    %1755 = vmatprep.subr.mxu0 0.0
    %1756 = vmatpush1.msra.mxu0 0.0
    %1757 = vmatprep.subr.mxu0 0.0
    %1758 = vmatpush1.msra.mxu0 0.0
    %1759 = vmatprep.subr.mxu0 0.0
    %1760 = vmatpush1.msra.mxu0 0.0
    %1761 = vmatprep.subr.mxu0 0.0
    %1762 = vmatpush1.msra.mxu0 0.0
    %1763 = vmatprep.subr.mxu0 0.0
    %1764 = vmatpush1.msra.mxu0 0.0
    %1765 = vmatprep.subr.mxu0 0.0
    %1766 = vmatpush1.msra.mxu0 0.0
    %1767 = vmatprep.subr.mxu0 0.0
    %1768 = vmatpush1.msra.mxu0 0.0
    %1769 = vmatprep.subr.mxu0 0.0
    %1770 = vmatpush1.msra.mxu0 0.0
    %1771 = vmatprep.subr.mxu0 0.0
    %1772 = vmatpush1.msra.mxu0 0.0
    %1773 = vmatprep.subr.mxu0 0.0
    %1774 = vmatpush1.msra.mxu0 0.0
    %1775 = vmatprep.subr.mxu0 0.0
    %1776 = vmatpush1.msra.mxu0 0.0
    %1777 = vmatprep.subr.mxu0 0.0
    %1778 = vmatpush1.msra.mxu0 0.0
    %1779 = vmatprep.subr.mxu0 0.0
    %1780 = vmatpush1.msra.mxu0 0.0
    %1781 = vmatprep.subr.mxu0 0.0
    %1782 = vmatpush1.msra.mxu0 0.0
    %1783 = vmatprep.subr.mxu0 0.0
    %1784 = vmatpush1.msra.mxu0 0.0
    %1785 = vmatprep.subr.mxu0 0.0
    %1786 = vmatpush1.msra.mxu0 0.0
    %1787 = vmatprep.subr.mxu0 0.0
    %1788 = vmatpush1.msra.mxu0 0.0
    %1789 = vmatprep.subr.mxu0 0.0
    %1790 = vmatpush1.msra.mxu0 0.0
    %1791 = vmatprep.subr.mxu0 0.0
    %1792 = vmatpush1.msra.mxu0 0.0
    %1793 = vmatprep.subr.mxu0 0.0
    %1794 = vmatpush1.msra.mxu0 0.0
    %1795 = vmatprep.subr.mxu0 0.0
    %1796 = vmatpush1.msra.mxu0 0.0
    %1797 = vmatprep.subr.mxu0 0.0
    %1798 = vmatpush1.msra.mxu0 0.0
    %1799 = vmatprep.subr.mxu0 0.0
    %1800 = vmatpush1.msra.mxu0 0.0
    %1801 = vmatprep.mubr.f32.mxu0 0.0
    %1802 = vmatmul.mubr.f32.gmra.mrb[0].mxu0 %v1732
    %v1803 = vpop.f32.mrb[0].mxu0
    %v1804 = vadd.f32 %v1730, %v1803
    %v1805 = vpop.f32.mrb[0].mxu0
    %1806 = vmatprep.mubr.f32.mxu0 0.0
    %1807 = vmatmul.mubr.f32.gmra.mrb[0].mxu0 %v1735
    %v1808 = vpop.f32.mrb[0].mxu0
    %v1809 = vadd.f32 %v1730, %v1808
    %v1810 = vpop.f32.mrb[0].mxu0
    %1811 = vdwg.mxu0
    %v1812 = vmax.f32 %v1804, 0.0
    %v1813 = vmax.f32 %v1809, 0.0
    %v1814 = vld [vmem:[%s5] sm:$0xff]
    %v1815 = vld [vmem:[%s5 + $0x8] sm:$0xff]
    %v1816 = vld [vmem:[%s5 + $0x10] sm:$0xff]
    %v1817 = vld [vmem:[%s5 + $0x18] sm:$0xff]
    %v1818 = vld [vmem:[%s5 + $0x20] sm:$0xff]
    %v1819 = vld [vmem:[%s5 + $0x28] sm:$0xff]
    %v1820 = vld [vmem:[%s5 + $0x30] sm:$0xff]
    %v1821 = vld [vmem:[%s5 + $0x38] sm:$0xff]
    %v1822 = vlaneseq
    %v1823 = vshrl.u32 %v1822, 7
    %v1824 = vsub.s32 7, %v1823
    %v1825 = vrot.slane %v60, %v1824
    %vm1826 = vcmask 523264
    %v1828 = vsel %vm1826, %v1812, 0
    %v1831 = vsel %vm1826, %v1813, 0
    %1833 = vmatprep.subr.mxu0 0.0
    %1834 = vmatpush1.msra.mxu0 %v1814
    %1835 = vmatprep.subr.mxu0 0.0
    %1836 = vmatpush1.msra.mxu0 %v1815
    %1837 = vmatprep.subr.mxu0 0.0
    %1838 = vmatpush1.msra.mxu0 %v1816
    %1839 = vmatprep.subr.mxu0 0.0
    %1840 = vmatpush1.msra.mxu0 %v1817
    %1841 = vmatprep.subr.mxu0 0.0
    %1842 = vmatpush1.msra.mxu0 %v1818
    %1843 = vmatprep.subr.mxu0 0.0
    %1844 = vmatpush1.msra.mxu0 %v1819
    %1845 = vmatprep.subr.mxu0 0.0
    %1846 = vmatpush1.msra.mxu0 %v1820
    %1847 = vmatprep.subr.mxu0 0.0
    %1848 = vmatpush1.msra.mxu0 %v1821
    %1849 = vmatprep.subr.mxu0 0.0
    %1850 = vmatpush1.msra.mxu0 0.0
    %1851 = vmatprep.subr.mxu0 0.0
    %1852 = vmatpush1.msra.mxu0 0.0
    %1853 = vmatprep.subr.mxu0 0.0
    %1854 = vmatpush1.msra.mxu0 0.0
    %1855 = vmatprep.subr.mxu0 0.0
    %1856 = vmatpush1.msra.mxu0 0.0
    %1857 = vmatprep.subr.mxu0 0.0
    %1858 = vmatpush1.msra.mxu0 0.0
    %1859 = vmatprep.subr.mxu0 0.0
    %1860 = vmatpush1.msra.mxu0 0.0
    %1861 = vmatprep.subr.mxu0 0.0
    %1862 = vmatpush1.msra.mxu0 0.0
    %1863 = vmatprep.subr.mxu0 0.0
    %1864 = vmatpush1.msra.mxu0 0.0
    %1865 = vmatprep.subr.mxu0 0.0
    %1866 = vmatpush1.msra.mxu0 0.0
    %1867 = vmatprep.subr.mxu0 0.0
    %1868 = vmatpush1.msra.mxu0 0.0
    %1869 = vmatprep.subr.mxu0 0.0
    %1870 = vmatpush1.msra.mxu0 0.0
    %1871 = vmatprep.subr.mxu0 0.0
    %1872 = vmatpush1.msra.mxu0 0.0
    %1873 = vmatprep.subr.mxu0 0.0
    %1874 = vmatpush1.msra.mxu0 0.0
    %1875 = vmatprep.subr.mxu0 0.0
    %1876 = vmatpush1.msra.mxu0 0.0
    %1877 = vmatprep.subr.mxu0 0.0
    %1878 = vmatpush1.msra.mxu0 0.0
    %1879 = vmatprep.subr.mxu0 0.0
    %1880 = vmatpush1.msra.mxu0 0.0
    %1881 = vmatprep.subr.mxu0 0.0
    %1882 = vmatpush1.msra.mxu0 0.0
    %1883 = vmatprep.subr.mxu0 0.0
    %1884 = vmatpush1.msra.mxu0 0.0
    %1885 = vmatprep.subr.mxu0 0.0
    %1886 = vmatpush1.msra.mxu0 0.0
    %1887 = vmatprep.subr.mxu0 0.0
    %1888 = vmatpush1.msra.mxu0 0.0
    %1889 = vmatprep.subr.mxu0 0.0
    %1890 = vmatpush1.msra.mxu0 0.0
    %1891 = vmatprep.subr.mxu0 0.0
    %1892 = vmatpush1.msra.mxu0 0.0
    %1893 = vmatprep.subr.mxu0 0.0
    %1894 = vmatpush1.msra.mxu0 0.0
    %1895 = vmatprep.subr.mxu0 0.0
    %1896 = vmatpush1.msra.mxu0 0.0
    %1897 = vmatprep.mubr.f32.mxu0 0.0
    %1898 = vmatmul.mubr.f32.gmra.mrb[0].mxu0 %v1828
    %v1899 = vpop.f32.mrb[0].mxu0
    %v1900 = vadd.f32 %v1825, %v1899
    %v1901 = vpop.f32.mrb[0].mxu0
    %1902 = vmatprep.mubr.f32.mxu0 0.0
    %1903 = vmatmul.mubr.f32.gmra.mrb[0].mxu0 %v1831
    %v1904 = vpop.f32.mrb[0].mxu0
    %v1905 = vadd.f32 %v1825, %v1904
    %v1906 = vpop.f32.mrb[0].mxu0
    %1907 = vdwg.mxu0
    %v1908 = vadd.f32 %v1900, %v1683
    %v1909 = vadd.f32 %v1905, %v1684
    %1910 = vst.msk [vmem:[#allocation7] sm:$0xff] %vm69, %v1908
    %1911 = vst.msk [vmem:[#allocation7 + $0x8] sm:$0xff] %vm69, %v1909
    // Predicated region
    $region38: #{tpu_custom_call.1} parent=1 // pred_check
      _
    $region39: #{tpu_custom_call.1} parent=1 // pred_check_branch
      %1913 = sbr.rel (0) target = $region41
    $region40: #{tpu_custom_call.1} parent=1 // pred_region
      %s1915 = ssub.s32 256, 256
      %1916 = vsyncadd [#allocation4], %s1915
      %s1917 = sshll.u32 [#allocation7], 4
      %s1918 = int_to_ptr.vmem [resolvable:$true] %s1917
      %1923 = dma.vmem_to_hbm [thread:$0]  %s1918, 256, %s7, [#allocation4], 128, 128, 8
    $region41: #{tpu_custom_call.1} parent=1 // pred_fallthru
      _
    // Predicated region
    $region42: #{tpu_custom_call.1} parent=1 // pred_check
      _
    $region43: #{tpu_custom_call.1} parent=1 // pred_check_branch
      %1925 = sbr.rel (0) target = $region45
    $region44: #{tpu_custom_call.1} parent=1 // pred_region
      %s1927 = ssub.s32 256, 256
      %1928 = vsyncadd [#allocation9], %s1927
      %s1929 = sshll.u32 [#allocation8], 4
      %s1930 = int_to_ptr.vmem [resolvable:$true] %s1929
      %1935 = dma.vmem_to_hbm [thread:$0]  %s1930, 256, %s8, [#allocation9], 128, 128, 8
    $region45: #{tpu_custom_call.1} parent=1 // pred_fallthru
      _
    // Predicated region
    $region46: #{tpu_custom_call.1} parent=1 // pred_check
      _
    $region47: #{tpu_custom_call.1} parent=1 // pred_check_branch
      %1937 = sbr.rel (0) target = $region49
    $region48: #{tpu_custom_call.1} parent=1 // pred_region
      %1938 = dma.done [#allocation4], 256
    $region49: #{tpu_custom_call.1} parent=1 // pred_fallthru
      _
    // Predicated region
    $region50: #{tpu_custom_call.1} parent=1 // pred_check
      _
    $region51: #{tpu_custom_call.1} parent=1 // pred_check_branch
      %1940 = sbr.rel (0) target = $region53
    $region52: #{tpu_custom_call.1} parent=1 // pred_region
      %1941 = dma.done [#allocation9], 256
    $region53: #{tpu_custom_call.1} parent=1 // pred_fallthru
      _
    %1942 = vsyncpa [#allocation3], 1
    %1943 = vsyncpa [#allocation6], 1
    %1944 = vsyncpa [#allocation4], 1
    %1945 = vsyncpa [#allocation9], 1

</llo_original>
